<compile_context>
chip_gen: v7x
topology: tpu7x:2x2x1
jax: 0.10.0
libtpu: 0.0.40
codegen_flags: <defaults>
</compile_context>

<pallas_src>
import functools

import jax
import jax.numpy as jnp
from jax.experimental import pallas as pl
from jax.experimental.pallas import tpu as pltpu


def concat_critic_kernel(x_ref, y_ref, wih_ref, whh_ref, b_ref, out_ref,
                         gx_ref, hseq_ref, *, layers, seq_len):
    """Multi-layer LSTM over one batch tile + negative squared cdist epilogue."""
    S = seq_len
    Bt = x_ref.shape[1]                      # batch tile (time-major input)
    D = x_ref.shape[2]

    # Flatten the time-major input so each layer's input projection is a single
    # MXU matmul over all timesteps (off the serial recurrence path).
    x_flat = x_ref[...].astype(jnp.float32).reshape(S * Bt, D)      # (S*Bt, D)

    h_last = None
    for l in range(layers):                  # static unroll: layer count is tiny
        wih = wih_ref[l].astype(jnp.float32)                        # (D, 4D)
        whh = whh_ref[l].astype(jnp.float32)                        # (D, 4D)
        b = b_ref[l].astype(jnp.float32)                            # (1, 4D)

        layer_in = x_flat if l == 0 else hseq_ref[...].reshape(S * Bt, D)
        # Hoisted input projection: all timesteps in one (S*Bt, D) @ (D, 4D).
        gx = jnp.dot(layer_in, wih, preferred_element_type=jnp.float32) + b
        gx_ref[...] = gx.reshape(S, Bt, 4 * D)

        write_seq = (l + 1 < layers)         # last layer only needs h at t = S-1

        def step(t, carry, *, whh=whh, write_seq=write_seq):
            h, c = carry
            # Only the (Bt, D) @ (D, 4D) recurrence matmul stays per-step.
            gates = gx_ref[t] + jnp.dot(h, whh,
                                        preferred_element_type=jnp.float32)
            # Gate order is (i, f, o, g) -> one fused sigmoid + one tanh.
            sig = jax.nn.sigmoid(gates[:, :3 * D])
            i_g = sig[:, 0 * D:1 * D]
            f_g = sig[:, 1 * D:2 * D]
            o_g = sig[:, 2 * D:3 * D]
            g_g = jnp.tanh(gates[:, 3 * D:])
            c = f_g * c + i_g * g_g
            h = o_g * jnp.tanh(c)
            if write_seq:
                hseq_ref[t] = h              # feeds the next layer's projection
            return h, c

        h0 = jnp.zeros((Bt, D), jnp.float32)
        c0 = jnp.zeros((Bt, D), jnp.float32)
        h_last, _ = jax.lax.fori_loop(0, S, step, (h0, c0), unroll=True)

    yhat = h_last                                            # == output[:, -1, :]
    y = y_ref[...].astype(jnp.float32)                       # (M, D)

    # scores = -cdist(yhat, y)**2 = 2*yhat@y.T - |yhat|^2 - |y|^2  (MXU, f32 acc)
    cross = jnp.einsum('bd,md->bm', yhat, y,
                       preferred_element_type=jnp.float32)   # (Bt, M)
    yhat_sq = jnp.sum(yhat * yhat, axis=-1, keepdims=True)   # (Bt, 1)
    y_sq = jnp.sum(y * y, axis=-1, keepdims=True)            # (M, 1)
    # TODO(synk): M < 128 -> masked partial stores; tile M in multiples of 128
    # if M ever grows.
    out_ref[...] = (2.0 * cross - yhat_sq - y_sq.T).astype(out_ref.dtype)


def concat_critic_forward(x, y, wih_t, whh_t, b, *, b_tile=None):
    """x: (batch, seq, dim) batch-first; y: (M, dim).
    wih_t/whh_t: (layers, dim, 4*dim) in gate order (i, f, o, g);
    b: (layers, 1, 4*dim) with b_ih + b_hh pre-summed (wrapper glue)."""
    batch, seq_len, dim = x.shape
    M = y.shape[0]
    layers = wih_t.shape[0]
    if b_tile is None:
        b_tile = 8 if batch % 8 == 0 else batch   # sublane-aligned batch tile
    assert batch % b_tile == 0

    x_tm = jnp.transpose(x, (1, 0, 2))            # time-major (S, B, D): glue only
    kernel = functools.partial(concat_critic_kernel, layers=layers,
                               seq_len=seq_len)
    return pl.pallas_call(
        kernel,
        out_shape=jax.ShapeDtypeStruct((batch, M), jnp.float32),
        grid_spec=pltpu.PrefetchScalarGridSpec(
            num_scalar_prefetch=0,
            grid=(batch // b_tile,),              # batch-parallel (v7x megacore)
            in_specs=[
                pl.BlockSpec((seq_len, b_tile, dim), lambda i: (0, i, 0)),
                pl.BlockSpec((M, dim), lambda i: (0, 0)),
                pl.BlockSpec((layers, dim, 4 * dim), lambda i: (0, 0, 0)),
                pl.BlockSpec((layers, dim, 4 * dim), lambda i: (0, 0, 0)),
                pl.BlockSpec((layers, 1, 4 * dim), lambda i: (0, 0, 0)),
            ],
            out_specs=pl.BlockSpec((b_tile, M), lambda i: (i, 0)),
            scratch_shapes=[
                pltpu.VMEM((seq_len, b_tile, 4 * dim), jnp.float32),  # gates_x
                pltpu.VMEM((seq_len, b_tile, dim), jnp.float32),      # h sequence
            ],
        ),
        compiler_params=pltpu.CompilerParams(
            dimension_semantics=("parallel",)),
    )(x_tm, y, wih_t, whh_t, b)


def _reference(x, y, wih, whh, bih, bhh):
    """Plain-JAX reference (PyTorch nn.LSTM semantics, original gate order)."""
    B, S, D = x.shape
    layers = wih.shape[0]
    layer_in = x
    h_last = None
    for l in range(layers):
        h = jnp.zeros((B, D), jnp.float32)
        c = jnp.zeros((B, D), jnp.float32)
        outs = []
        for t in range(S):
            g = layer_in[:, t, :] @ wih[l].T + h @ whh[l].T + bih[l] + bhh[l]
            i_g = jax.nn.sigmoid(g[:, 0 * D:1 * D])
            f_g = jax.nn.sigmoid(g[:, 1 * D:2 * D])
            g_g = jnp.tanh(g[:, 2 * D:3 * D])
            o_g = jax.nn.sigmoid(g[:, 3 * D:4 * D])
            c = f_g * c + i_g * g_g
            h = o_g * jnp.tanh(c)
            outs.append(h)
        layer_in = jnp.stack(outs, axis=1)
        h_last = h
    diff = h_last[:, None, :] - y[None, :, :]
    return -jnp.sum(diff * diff, axis=-1)


if __name__ == "__main__":
    # ConcatCritic(dim=16, hidden_dim=32, layers=2, activation='relu'); MLP unused in forward.
    dim, layers = 16, 2
    batch, seq_len = 8, 8

    key = jax.random.PRNGKey(0)
    keys = jax.random.split(key, 6)
    x = jax.random.normal(keys[0], (batch, seq_len, dim), dtype=jnp.float32)
    y = jax.random.normal(keys[1], (batch, dim), dtype=jnp.float32)

    # Deterministic LSTM params, PyTorch default init: U(-1/sqrt(hidden), 1/sqrt(hidden)).
    k = 1.0 / jnp.sqrt(jnp.float32(dim))
    wih = jax.random.uniform(keys[2], (layers, 4 * dim, dim), minval=-k, maxval=k)
    whh = jax.random.uniform(keys[3], (layers, 4 * dim, dim), minval=-k, maxval=k)
    bih = jax.random.uniform(keys[4], (layers, 4 * dim), minval=-k, maxval=k)
    bhh = jax.random.uniform(keys[5], (layers, 4 * dim), minval=-k, maxval=k)

    # Glue for the kernel layout: permute gates (i,f,g,o)->(i,f,o,g), transpose
    # weights to (layers, D, 4D), and pre-sum the two biases.
    perm = jnp.concatenate([jnp.arange(0, dim), jnp.arange(dim, 2 * dim),
                            jnp.arange(3 * dim, 4 * dim),
                            jnp.arange(2 * dim, 3 * dim)])
    wih_t = jnp.transpose(wih[:, perm, :], (0, 2, 1))        # (layers, D, 4D)
    whh_t = jnp.transpose(whh[:, perm, :], (0, 2, 1))        # (layers, D, 4D)
    b = (bih + bhh)[:, perm][:, None, :]                     # (layers, 1, 4D)

    scores = jax.block_until_ready(concat_critic_forward(x, y, wih_t, whh_t, b))
    ref = _reference(x, y, wih, whh, bih, bhh)

    assert scores.shape == (batch, batch), scores.shape
    assert jnp.allclose(scores, ref, atol=1e-4, rtol=1e-4), (
        f"max abs err = {jnp.max(jnp.abs(scores - ref))}")
    print("KERNEL_OK")
</pallas_src>

<mosaic_0001>
module attributes {stable_mosaic.version = 11 : i64} {
  func.func @concat_critic_kernel(%arg0: i32, %arg1: memref<8x8x16xf32, #tpu.memory_space<vmem>>, %arg2: memref<8x16xf32, #tpu.memory_space<vmem>>, %arg3: memref<2x16x64xf32, #tpu.memory_space<vmem>>, %arg4: memref<2x16x64xf32, #tpu.memory_space<vmem>>, %arg5: memref<2x1x64xf32, #tpu.memory_space<vmem>>, %arg6: memref<8x8xf32, #tpu.memory_space<vmem>>, %arg7: memref<8x8x64xf32, #tpu.memory_space<vmem>>, %arg8: memref<8x8x16xf32, #tpu.memory_space<vmem>>) attributes {dimension_semantics = [#tpu.dimension_semantics<parallel>], iteration_bounds = array<i64: 1>, scalar_prefetch = 0 : i64, scratch_operands = 2 : i64, tpu.core_type = #tpu.core_type<tc>, window_params = [{transform_indices = @transform_0, window_bounds = array<i64: 8, 8, 16>}, {pipeline_mode = #tpu.pipeline_mode<synchronous>, transform_indices = @transform_1, window_bounds = array<i64: 8, 16>}, {pipeline_mode = #tpu.pipeline_mode<synchronous>, transform_indices = @transform_2, window_bounds = array<i64: 2, 16, 64>}, {pipeline_mode = #tpu.pipeline_mode<synchronous>, transform_indices = @transform_3, window_bounds = array<i64: 2, 16, 64>}, {pipeline_mode = #tpu.pipeline_mode<synchronous>, transform_indices = @transform_4, window_bounds = array<i64: 2, 1, 64>}, {transform_indices = @transform_5, window_bounds = array<i64: 8, 8>}]} {
    %c0 = arith.constant 0 : index
    %c0_0 = arith.constant 0 : index
    %c0_1 = arith.constant 0 : index
    %0 = vector.load %arg1[%c0, %c0_0, %c0_1] : memref<8x8x16xf32, #tpu.memory_space<vmem>>, vector<8x8x16xf32>
    %1 = vector.shape_cast %0 : vector<8x8x16xf32> to vector<64x16xf32>
    %c0_2 = arith.constant 0 : index
    %c0_3 = arith.constant 0 : index
    %c0_4 = arith.constant 0 : index
    %2 = vector.load %arg3[%c0_2, %c0_3, %c0_4] : memref<2x16x64xf32, #tpu.memory_space<vmem>>, vector<1x16x64xf32>
    %3 = vector.shape_cast %2 : vector<1x16x64xf32> to vector<16x64xf32>
    %c0_5 = arith.constant 0 : index
    %c0_6 = arith.constant 0 : index
    %c0_7 = arith.constant 0 : index
    %4 = vector.load %arg4[%c0_5, %c0_6, %c0_7] : memref<2x16x64xf32, #tpu.memory_space<vmem>>, vector<1x16x64xf32>
    %5 = vector.shape_cast %4 : vector<1x16x64xf32> to vector<16x64xf32>
    %c0_8 = arith.constant 0 : index
    %c0_9 = arith.constant 0 : index
    %c0_10 = arith.constant 0 : index
    %6 = vector.load %arg5[%c0_8, %c0_9, %c0_10] : memref<2x1x64xf32, #tpu.memory_space<vmem>>, vector<1x1x64xf32>
    %7 = vector.shape_cast %6 : vector<1x1x64xf32> to vector<1x64xf32>
    %cst = arith.constant dense<0.000000e+00> : vector<64x64xf32>
    %8 = tpu.matmul %1, %3, %cst {dimension_numbers = #tpu.dot_dimension_numbers<[1], [0], [0], [1], [0, 0, 1, 1], [], []>} : vector<64x16xf32>, vector<16x64xf32>, vector<64x64xf32> -> vector<64x64xf32>
    %9 = vector.broadcast %7 : vector<1x64xf32> to vector<64x64xf32>
    %10 = arith.addf %8, %9 : vector<64x64xf32>
    %11 = vector.shape_cast %10 : vector<64x64xf32> to vector<8x8x64xf32>
    %c0_11 = arith.constant 0 : index
    %c0_12 = arith.constant 0 : index
    %c0_13 = arith.constant 0 : index
    %12 = vector.load %arg7[%c0_11, %c0_12, %c0_13] : memref<8x8x64xf32, #tpu.memory_space<vmem>>, vector<8x8x64xf32>
    tpu.vector_store %arg7[%c0_11, %c0_12, %c0_13], %11 {strides = array<i32>} : memref<8x8x64xf32, #tpu.memory_space<vmem>>, vector<8x8x64xf32>,
    %cst_14 = arith.constant 0.000000e+00 : f32
    %13 = vector.broadcast %cst_14 : f32 to vector<8x16xf32>
    %cst_15 = arith.constant 0.000000e+00 : f32
    %14 = vector.broadcast %cst_15 : f32 to vector<8x16xf32>
    %c0_i32 = arith.constant 0 : i32
    %15 = arith.index_cast %c0_i32 : i32 to index
    %c0_16 = arith.constant 0 : index
    %c0_17 = arith.constant 0 : index
    %16 = vector.load %arg7[%15, %c0_16, %c0_17] : memref<8x8x64xf32, #tpu.memory_space<vmem>>, vector<1x8x64xf32>
    %17 = vector.shape_cast %16 : vector<1x8x64xf32> to vector<8x64xf32>
    %cst_18 = arith.constant dense<0.000000e+00> : vector<8x64xf32>
    %18 = tpu.matmul %13, %5, %cst_18 {dimension_numbers = #tpu.dot_dimension_numbers<[1], [0], [0], [1], [0, 0, 1, 1], [], []>} : vector<8x16xf32>, vector<16x64xf32>, vector<8x64xf32> -> vector<8x64xf32>
    %19 = arith.addf %17, %18 : vector<8x64xf32>
    %20 = vector.extract_strided_slice %19 {offsets = [0, 0], sizes = [8, 48], strides = [1, 1]} : vector<8x64xf32> to vector<8x48xf32>
    %21 = arith.negf %20 : vector<8x48xf32>
    %22 = math.exp %21 : vector<8x48xf32>
    %cst_19 = arith.constant 1.000000e+00 : f32
    %23 = vector.broadcast %cst_19 : f32 to vector<8x48xf32>
    %24 = arith.addf %23, %22 : vector<8x48xf32>
    %25 = arith.divf %23, %24 : vector<8x48xf32>
    %26 = vector.extract_strided_slice %25 {offsets = [0, 0], sizes = [8, 16], strides = [1, 1]} : vector<8x48xf32> to vector<8x16xf32>
    %27 = vector.extract_strided_slice %25 {offsets = [0, 16], sizes = [8, 16], strides = [1, 1]} : vector<8x48xf32> to vector<8x16xf32>
    %28 = vector.extract_strided_slice %25 {offsets = [0, 32], sizes = [8, 16], strides = [1, 1]} : vector<8x48xf32> to vector<8x16xf32>
    %29 = vector.extract_strided_slice %19 {offsets = [0, 48], sizes = [8, 16], strides = [1, 1]} : vector<8x64xf32> to vector<8x16xf32>
    %30 = math.tanh %29 : vector<8x16xf32>
    %31 = arith.mulf %27, %14 : vector<8x16xf32>
    %32 = arith.mulf %26, %30 : vector<8x16xf32>
    %33 = arith.addf %31, %32 : vector<8x16xf32>
    %34 = math.tanh %33 : vector<8x16xf32>
    %35 = arith.mulf %28, %34 : vector<8x16xf32>
    %36 = arith.index_cast %c0_i32 : i32 to index
    %c0_20 = arith.constant 0 : index
    %c0_21 = arith.constant 0 : index
    %37 = vector.load %arg8[%36, %c0_20, %c0_21] : memref<8x8x16xf32, #tpu.memory_space<vmem>>, vector<1x8x16xf32>
    %38 = vector.shape_cast %37 : vector<1x8x16xf32> to vector<8x16xf32>
    %39 = vector.shape_cast %35 : vector<8x16xf32> to vector<1x8x16xf32>
    tpu.vector_store %arg8[%36, %c0_20, %c0_21], %39 {strides = array<i32>} : memref<8x8x16xf32, #tpu.memory_space<vmem>>, vector<1x8x16xf32>,
    %c1_i32 = arith.constant 1 : i32
    %40 = arith.index_cast %c1_i32 : i32 to index
    %c0_22 = arith.constant 0 : index
    %c0_23 = arith.constant 0 : index
    %41 = vector.load %arg7[%40, %c0_22, %c0_23] : memref<8x8x64xf32, #tpu.memory_space<vmem>>, vector<1x8x64xf32>
    %42 = vector.shape_cast %41 : vector<1x8x64xf32> to vector<8x64xf32>
    %cst_24 = arith.constant dense<0.000000e+00> : vector<8x64xf32>
    %43 = tpu.matmul %35, %5, %cst_24 {dimension_numbers = #tpu.dot_dimension_numbers<[1], [0], [0], [1], [0, 0, 1, 1], [], []>} : vector<8x16xf32>, vector<16x64xf32>, vector<8x64xf32> -> vector<8x64xf32>
    %44 = arith.addf %42, %43 : vector<8x64xf32>
    %45 = vector.extract_strided_slice %44 {offsets = [0, 0], sizes = [8, 48], strides = [1, 1]} : vector<8x64xf32> to vector<8x48xf32>
    %46 = arith.negf %45 : vector<8x48xf32>
    %47 = math.exp %46 : vector<8x48xf32>
    %cst_25 = arith.constant 1.000000e+00 : f32
    %48 = vector.broadcast %cst_25 : f32 to vector<8x48xf32>
    %49 = arith.addf %48, %47 : vector<8x48xf32>
    %50 = arith.divf %48, %49 : vector<8x48xf32>
    %51 = vector.extract_strided_slice %50 {offsets = [0, 0], sizes = [8, 16], strides = [1, 1]} : vector<8x48xf32> to vector<8x16xf32>
    %52 = vector.extract_strided_slice %50 {offsets = [0, 16], sizes = [8, 16], strides = [1, 1]} : vector<8x48xf32> to vector<8x16xf32>
    %53 = vector.extract_strided_slice %50 {offsets = [0, 32], sizes = [8, 16], strides = [1, 1]} : vector<8x48xf32> to vector<8x16xf32>
    %54 = vector.extract_strided_slice %44 {offsets = [0, 48], sizes = [8, 16], strides = [1, 1]} : vector<8x64xf32> to vector<8x16xf32>
    %55 = math.tanh %54 : vector<8x16xf32>
    %56 = arith.mulf %52, %33 : vector<8x16xf32>
    %57 = arith.mulf %51, %55 : vector<8x16xf32>
    %58 = arith.addf %56, %57 : vector<8x16xf32>
    %59 = math.tanh %58 : vector<8x16xf32>
    %60 = arith.mulf %53, %59 : vector<8x16xf32>
    %61 = arith.index_cast %c1_i32 : i32 to index
    %c0_26 = arith.constant 0 : index
    %c0_27 = arith.constant 0 : index
    %62 = vector.load %arg8[%61, %c0_26, %c0_27] : memref<8x8x16xf32, #tpu.memory_space<vmem>>, vector<1x8x16xf32>
    %63 = vector.shape_cast %62 : vector<1x8x16xf32> to vector<8x16xf32>
    %64 = vector.shape_cast %60 : vector<8x16xf32> to vector<1x8x16xf32>
    tpu.vector_store %arg8[%61, %c0_26, %c0_27], %64 {strides = array<i32>} : memref<8x8x16xf32, #tpu.memory_space<vmem>>, vector<1x8x16xf32>,
    %c2_i32 = arith.constant 2 : i32
    %65 = arith.index_cast %c2_i32 : i32 to index
    %c0_28 = arith.constant 0 : index
    %c0_29 = arith.constant 0 : index
    %66 = vector.load %arg7[%65, %c0_28, %c0_29] : memref<8x8x64xf32, #tpu.memory_space<vmem>>, vector<1x8x64xf32>
    %67 = vector.shape_cast %66 : vector<1x8x64xf32> to vector<8x64xf32>
    %cst_30 = arith.constant dense<0.000000e+00> : vector<8x64xf32>
    %68 = tpu.matmul %60, %5, %cst_30 {dimension_numbers = #tpu.dot_dimension_numbers<[1], [0], [0], [1], [0, 0, 1, 1], [], []>} : vector<8x16xf32>, vector<16x64xf32>, vector<8x64xf32> -> vector<8x64xf32>
    %69 = arith.addf %67, %68 : vector<8x64xf32>
    %70 = vector.extract_strided_slice %69 {offsets = [0, 0], sizes = [8, 48], strides = [1, 1]} : vector<8x64xf32> to vector<8x48xf32>
    %71 = arith.negf %70 : vector<8x48xf32>
    %72 = math.exp %71 : vector<8x48xf32>
    %cst_31 = arith.constant 1.000000e+00 : f32
    %73 = vector.broadcast %cst_31 : f32 to vector<8x48xf32>
    %74 = arith.addf %73, %72 : vector<8x48xf32>
    %75 = arith.divf %73, %74 : vector<8x48xf32>
    %76 = vector.extract_strided_slice %75 {offsets = [0, 0], sizes = [8, 16], strides = [1, 1]} : vector<8x48xf32> to vector<8x16xf32>
    %77 = vector.extract_strided_slice %75 {offsets = [0, 16], sizes = [8, 16], strides = [1, 1]} : vector<8x48xf32> to vector<8x16xf32>
    %78 = vector.extract_strided_slice %75 {offsets = [0, 32], sizes = [8, 16], strides = [1, 1]} : vector<8x48xf32> to vector<8x16xf32>
    %79 = vector.extract_strided_slice %69 {offsets = [0, 48], sizes = [8, 16], strides = [1, 1]} : vector<8x64xf32> to vector<8x16xf32>
    %80 = math.tanh %79 : vector<8x16xf32>
    %81 = arith.mulf %77, %58 : vector<8x16xf32>
    %82 = arith.mulf %76, %80 : vector<8x16xf32>
    %83 = arith.addf %81, %82 : vector<8x16xf32>
    %84 = math.tanh %83 : vector<8x16xf32>
    %85 = arith.mulf %78, %84 : vector<8x16xf32>
    %86 = arith.index_cast %c2_i32 : i32 to index
    %c0_32 = arith.constant 0 : index
    %c0_33 = arith.constant 0 : index
    %87 = vector.load %arg8[%86, %c0_32, %c0_33] : memref<8x8x16xf32, #tpu.memory_space<vmem>>, vector<1x8x16xf32>
    %88 = vector.shape_cast %87 : vector<1x8x16xf32> to vector<8x16xf32>
    %89 = vector.shape_cast %85 : vector<8x16xf32> to vector<1x8x16xf32>
    tpu.vector_store %arg8[%86, %c0_32, %c0_33], %89 {strides = array<i32>} : memref<8x8x16xf32, #tpu.memory_space<vmem>>, vector<1x8x16xf32>,
    %c3_i32 = arith.constant 3 : i32
    %90 = arith.index_cast %c3_i32 : i32 to index
    %c0_34 = arith.constant 0 : index
    %c0_35 = arith.constant 0 : index
    %91 = vector.load %arg7[%90, %c0_34, %c0_35] : memref<8x8x64xf32, #tpu.memory_space<vmem>>, vector<1x8x64xf32>
    %92 = vector.shape_cast %91 : vector<1x8x64xf32> to vector<8x64xf32>
    %cst_36 = arith.constant dense<0.000000e+00> : vector<8x64xf32>
    %93 = tpu.matmul %85, %5, %cst_36 {dimension_numbers = #tpu.dot_dimension_numbers<[1], [0], [0], [1], [0, 0, 1, 1], [], []>} : vector<8x16xf32>, vector<16x64xf32>, vector<8x64xf32> -> vector<8x64xf32>
    %94 = arith.addf %92, %93 : vector<8x64xf32>
    %95 = vector.extract_strided_slice %94 {offsets = [0, 0], sizes = [8, 48], strides = [1, 1]} : vector<8x64xf32> to vector<8x48xf32>
    %96 = arith.negf %95 : vector<8x48xf32>
    %97 = math.exp %96 : vector<8x48xf32>
    %cst_37 = arith.constant 1.000000e+00 : f32
    %98 = vector.broadcast %cst_37 : f32 to vector<8x48xf32>
    %99 = arith.addf %98, %97 : vector<8x48xf32>
    %100 = arith.divf %98, %99 : vector<8x48xf32>
    %101 = vector.extract_strided_slice %100 {offsets = [0, 0], sizes = [8, 16], strides = [1, 1]} : vector<8x48xf32> to vector<8x16xf32>
    %102 = vector.extract_strided_slice %100 {offsets = [0, 16], sizes = [8, 16], strides = [1, 1]} : vector<8x48xf32> to vector<8x16xf32>
    %103 = vector.extract_strided_slice %100 {offsets = [0, 32], sizes = [8, 16], strides = [1, 1]} : vector<8x48xf32> to vector<8x16xf32>
    %104 = vector.extract_strided_slice %94 {offsets = [0, 48], sizes = [8, 16], strides = [1, 1]} : vector<8x64xf32> to vector<8x16xf32>
    %105 = math.tanh %104 : vector<8x16xf32>
    %106 = arith.mulf %102, %83 : vector<8x16xf32>
    %107 = arith.mulf %101, %105 : vector<8x16xf32>
    %108 = arith.addf %106, %107 : vector<8x16xf32>
    %109 = math.tanh %108 : vector<8x16xf32>
    %110 = arith.mulf %103, %109 : vector<8x16xf32>
    %111 = arith.index_cast %c3_i32 : i32 to index
    %c0_38 = arith.constant 0 : index
    %c0_39 = arith.constant 0 : index
    %112 = vector.load %arg8[%111, %c0_38, %c0_39] : memref<8x8x16xf32, #tpu.memory_space<vmem>>, vector<1x8x16xf32>
    %113 = vector.shape_cast %112 : vector<1x8x16xf32> to vector<8x16xf32>
    %114 = vector.shape_cast %110 : vector<8x16xf32> to vector<1x8x16xf32>
    tpu.vector_store %arg8[%111, %c0_38, %c0_39], %114 {strides = array<i32>} : memref<8x8x16xf32, #tpu.memory_space<vmem>>, vector<1x8x16xf32>,
    %c4_i32 = arith.constant 4 : i32
    %115 = arith.index_cast %c4_i32 : i32 to index
    %c0_40 = arith.constant 0 : index
    %c0_41 = arith.constant 0 : index
    %116 = vector.load %arg7[%115, %c0_40, %c0_41] : memref<8x8x64xf32, #tpu.memory_space<vmem>>, vector<1x8x64xf32>
    %117 = vector.shape_cast %116 : vector<1x8x64xf32> to vector<8x64xf32>
    %cst_42 = arith.constant dense<0.000000e+00> : vector<8x64xf32>
    %118 = tpu.matmul %110, %5, %cst_42 {dimension_numbers = #tpu.dot_dimension_numbers<[1], [0], [0], [1], [0, 0, 1, 1], [], []>} : vector<8x16xf32>, vector<16x64xf32>, vector<8x64xf32> -> vector<8x64xf32>
    %119 = arith.addf %117, %118 : vector<8x64xf32>
    %120 = vector.extract_strided_slice %119 {offsets = [0, 0], sizes = [8, 48], strides = [1, 1]} : vector<8x64xf32> to vector<8x48xf32>
    %121 = arith.negf %120 : vector<8x48xf32>
    %122 = math.exp %121 : vector<8x48xf32>
    %cst_43 = arith.constant 1.000000e+00 : f32
    %123 = vector.broadcast %cst_43 : f32 to vector<8x48xf32>
    %124 = arith.addf %123, %122 : vector<8x48xf32>
    %125 = arith.divf %123, %124 : vector<8x48xf32>
    %126 = vector.extract_strided_slice %125 {offsets = [0, 0], sizes = [8, 16], strides = [1, 1]} : vector<8x48xf32> to vector<8x16xf32>
    %127 = vector.extract_strided_slice %125 {offsets = [0, 16], sizes = [8, 16], strides = [1, 1]} : vector<8x48xf32> to vector<8x16xf32>
    %128 = vector.extract_strided_slice %125 {offsets = [0, 32], sizes = [8, 16], strides = [1, 1]} : vector<8x48xf32> to vector<8x16xf32>
    %129 = vector.extract_strided_slice %119 {offsets = [0, 48], sizes = [8, 16], strides = [1, 1]} : vector<8x64xf32> to vector<8x16xf32>
    %130 = math.tanh %129 : vector<8x16xf32>
    %131 = arith.mulf %127, %108 : vector<8x16xf32>
    %132 = arith.mulf %126, %130 : vector<8x16xf32>
    %133 = arith.addf %131, %132 : vector<8x16xf32>
    %134 = math.tanh %133 : vector<8x16xf32>
    %135 = arith.mulf %128, %134 : vector<8x16xf32>
    %136 = arith.index_cast %c4_i32 : i32 to index
    %c0_44 = arith.constant 0 : index
    %c0_45 = arith.constant 0 : index
    %137 = vector.load %arg8[%136, %c0_44, %c0_45] : memref<8x8x16xf32, #tpu.memory_space<vmem>>, vector<1x8x16xf32>
    %138 = vector.shape_cast %137 : vector<1x8x16xf32> to vector<8x16xf32>
    %139 = vector.shape_cast %135 : vector<8x16xf32> to vector<1x8x16xf32>
    tpu.vector_store %arg8[%136, %c0_44, %c0_45], %139 {strides = array<i32>} : memref<8x8x16xf32, #tpu.memory_space<vmem>>, vector<1x8x16xf32>,
    %c5_i32 = arith.constant 5 : i32
    %140 = arith.index_cast %c5_i32 : i32 to index
    %c0_46 = arith.constant 0 : index
    %c0_47 = arith.constant 0 : index
    %141 = vector.load %arg7[%140, %c0_46, %c0_47] : memref<8x8x64xf32, #tpu.memory_space<vmem>>, vector<1x8x64xf32>
    %142 = vector.shape_cast %141 : vector<1x8x64xf32> to vector<8x64xf32>
    %cst_48 = arith.constant dense<0.000000e+00> : vector<8x64xf32>
    %143 = tpu.matmul %135, %5, %cst_48 {dimension_numbers = #tpu.dot_dimension_numbers<[1], [0], [0], [1], [0, 0, 1, 1], [], []>} : vector<8x16xf32>, vector<16x64xf32>, vector<8x64xf32> -> vector<8x64xf32>
    %144 = arith.addf %142, %143 : vector<8x64xf32>
    %145 = vector.extract_strided_slice %144 {offsets = [0, 0], sizes = [8, 48], strides = [1, 1]} : vector<8x64xf32> to vector<8x48xf32>
    %146 = arith.negf %145 : vector<8x48xf32>
    %147 = math.exp %146 : vector<8x48xf32>
    %cst_49 = arith.constant 1.000000e+00 : f32
    %148 = vector.broadcast %cst_49 : f32 to vector<8x48xf32>
    %149 = arith.addf %148, %147 : vector<8x48xf32>
    %150 = arith.divf %148, %149 : vector<8x48xf32>
    %151 = vector.extract_strided_slice %150 {offsets = [0, 0], sizes = [8, 16], strides = [1, 1]} : vector<8x48xf32> to vector<8x16xf32>
    %152 = vector.extract_strided_slice %150 {offsets = [0, 16], sizes = [8, 16], strides = [1, 1]} : vector<8x48xf32> to vector<8x16xf32>
    %153 = vector.extract_strided_slice %150 {offsets = [0, 32], sizes = [8, 16], strides = [1, 1]} : vector<8x48xf32> to vector<8x16xf32>
    %154 = vector.extract_strided_slice %144 {offsets = [0, 48], sizes = [8, 16], strides = [1, 1]} : vector<8x64xf32> to vector<8x16xf32>
    %155 = math.tanh %154 : vector<8x16xf32>
    %156 = arith.mulf %152, %133 : vector<8x16xf32>
    %157 = arith.mulf %151, %155 : vector<8x16xf32>
    %158 = arith.addf %156, %157 : vector<8x16xf32>
    %159 = math.tanh %158 : vector<8x16xf32>
    %160 = arith.mulf %153, %159 : vector<8x16xf32>
    %161 = arith.index_cast %c5_i32 : i32 to index
    %c0_50 = arith.constant 0 : index
    %c0_51 = arith.constant 0 : index
    %162 = vector.load %arg8[%161, %c0_50, %c0_51] : memref<8x8x16xf32, #tpu.memory_space<vmem>>, vector<1x8x16xf32>
    %163 = vector.shape_cast %162 : vector<1x8x16xf32> to vector<8x16xf32>
    %164 = vector.shape_cast %160 : vector<8x16xf32> to vector<1x8x16xf32>
    tpu.vector_store %arg8[%161, %c0_50, %c0_51], %164 {strides = array<i32>} : memref<8x8x16xf32, #tpu.memory_space<vmem>>, vector<1x8x16xf32>,
    %c6_i32 = arith.constant 6 : i32
    %165 = arith.index_cast %c6_i32 : i32 to index
    %c0_52 = arith.constant 0 : index
    %c0_53 = arith.constant 0 : index
    %166 = vector.load %arg7[%165, %c0_52, %c0_53] : memref<8x8x64xf32, #tpu.memory_space<vmem>>, vector<1x8x64xf32>
    %167 = vector.shape_cast %166 : vector<1x8x64xf32> to vector<8x64xf32>
    %cst_54 = arith.constant dense<0.000000e+00> : vector<8x64xf32>
    %168 = tpu.matmul %160, %5, %cst_54 {dimension_numbers = #tpu.dot_dimension_numbers<[1], [0], [0], [1], [0, 0, 1, 1], [], []>} : vector<8x16xf32>, vector<16x64xf32>, vector<8x64xf32> -> vector<8x64xf32>
    %169 = arith.addf %167, %168 : vector<8x64xf32>
    %170 = vector.extract_strided_slice %169 {offsets = [0, 0], sizes = [8, 48], strides = [1, 1]} : vector<8x64xf32> to vector<8x48xf32>
    %171 = arith.negf %170 : vector<8x48xf32>
    %172 = math.exp %171 : vector<8x48xf32>
    %cst_55 = arith.constant 1.000000e+00 : f32
    %173 = vector.broadcast %cst_55 : f32 to vector<8x48xf32>
    %174 = arith.addf %173, %172 : vector<8x48xf32>
    %175 = arith.divf %173, %174 : vector<8x48xf32>
    %176 = vector.extract_strided_slice %175 {offsets = [0, 0], sizes = [8, 16], strides = [1, 1]} : vector<8x48xf32> to vector<8x16xf32>
    %177 = vector.extract_strided_slice %175 {offsets = [0, 16], sizes = [8, 16], strides = [1, 1]} : vector<8x48xf32> to vector<8x16xf32>
    %178 = vector.extract_strided_slice %175 {offsets = [0, 32], sizes = [8, 16], strides = [1, 1]} : vector<8x48xf32> to vector<8x16xf32>
    %179 = vector.extract_strided_slice %169 {offsets = [0, 48], sizes = [8, 16], strides = [1, 1]} : vector<8x64xf32> to vector<8x16xf32>
    %180 = math.tanh %179 : vector<8x16xf32>
    %181 = arith.mulf %177, %158 : vector<8x16xf32>
    %182 = arith.mulf %176, %180 : vector<8x16xf32>
    %183 = arith.addf %181, %182 : vector<8x16xf32>
    %184 = math.tanh %183 : vector<8x16xf32>
    %185 = arith.mulf %178, %184 : vector<8x16xf32>
    %186 = arith.index_cast %c6_i32 : i32 to index
    %c0_56 = arith.constant 0 : index
    %c0_57 = arith.constant 0 : index
    %187 = vector.load %arg8[%186, %c0_56, %c0_57] : memref<8x8x16xf32, #tpu.memory_space<vmem>>, vector<1x8x16xf32>
    %188 = vector.shape_cast %187 : vector<1x8x16xf32> to vector<8x16xf32>
    %189 = vector.shape_cast %185 : vector<8x16xf32> to vector<1x8x16xf32>
    tpu.vector_store %arg8[%186, %c0_56, %c0_57], %189 {strides = array<i32>} : memref<8x8x16xf32, #tpu.memory_space<vmem>>, vector<1x8x16xf32>,
    %c7_i32 = arith.constant 7 : i32
    %190 = arith.index_cast %c7_i32 : i32 to index
    %c0_58 = arith.constant 0 : index
    %c0_59 = arith.constant 0 : index
    %191 = vector.load %arg7[%190, %c0_58, %c0_59] : memref<8x8x64xf32, #tpu.memory_space<vmem>>, vector<1x8x64xf32>
    %192 = vector.shape_cast %191 : vector<1x8x64xf32> to vector<8x64xf32>
    %cst_60 = arith.constant dense<0.000000e+00> : vector<8x64xf32>
    %193 = tpu.matmul %185, %5, %cst_60 {dimension_numbers = #tpu.dot_dimension_numbers<[1], [0], [0], [1], [0, 0, 1, 1], [], []>} : vector<8x16xf32>, vector<16x64xf32>, vector<8x64xf32> -> vector<8x64xf32>
    %194 = arith.addf %192, %193 : vector<8x64xf32>
    %195 = vector.extract_strided_slice %194 {offsets = [0, 0], sizes = [8, 48], strides = [1, 1]} : vector<8x64xf32> to vector<8x48xf32>
    %196 = arith.negf %195 : vector<8x48xf32>
    %197 = math.exp %196 : vector<8x48xf32>
    %cst_61 = arith.constant 1.000000e+00 : f32
    %198 = vector.broadcast %cst_61 : f32 to vector<8x48xf32>
    %199 = arith.addf %198, %197 : vector<8x48xf32>
    %200 = arith.divf %198, %199 : vector<8x48xf32>
    %201 = vector.extract_strided_slice %200 {offsets = [0, 0], sizes = [8, 16], strides = [1, 1]} : vector<8x48xf32> to vector<8x16xf32>
    %202 = vector.extract_strided_slice %200 {offsets = [0, 16], sizes = [8, 16], strides = [1, 1]} : vector<8x48xf32> to vector<8x16xf32>
    %203 = vector.extract_strided_slice %200 {offsets = [0, 32], sizes = [8, 16], strides = [1, 1]} : vector<8x48xf32> to vector<8x16xf32>
    %204 = vector.extract_strided_slice %194 {offsets = [0, 48], sizes = [8, 16], strides = [1, 1]} : vector<8x64xf32> to vector<8x16xf32>
    %205 = math.tanh %204 : vector<8x16xf32>
    %206 = arith.mulf %202, %183 : vector<8x16xf32>
    %207 = arith.mulf %201, %205 : vector<8x16xf32>
    %208 = arith.addf %206, %207 : vector<8x16xf32>
    %209 = math.tanh %208 : vector<8x16xf32>
    %210 = arith.mulf %203, %209 : vector<8x16xf32>
    %211 = arith.index_cast %c7_i32 : i32 to index
    %c0_62 = arith.constant 0 : index
    %c0_63 = arith.constant 0 : index
    %212 = vector.load %arg8[%211, %c0_62, %c0_63] : memref<8x8x16xf32, #tpu.memory_space<vmem>>, vector<1x8x16xf32>
    %213 = vector.shape_cast %212 : vector<1x8x16xf32> to vector<8x16xf32>
    %214 = vector.shape_cast %210 : vector<8x16xf32> to vector<1x8x16xf32>
    tpu.vector_store %arg8[%211, %c0_62, %c0_63], %214 {strides = array<i32>} : memref<8x8x16xf32, #tpu.memory_space<vmem>>, vector<1x8x16xf32>,
    %c8_i32 = arith.constant 8 : i32
    %c1 = arith.constant 1 : index
    %c0_64 = arith.constant 0 : index
    %c0_65 = arith.constant 0 : index
    %215 = vector.load %arg3[%c1, %c0_64, %c0_65] : memref<2x16x64xf32, #tpu.memory_space<vmem>>, vector<1x16x64xf32>
    %216 = vector.shape_cast %215 : vector<1x16x64xf32> to vector<16x64xf32>
    %c1_66 = arith.constant 1 : index
    %c0_67 = arith.constant 0 : index
    %c0_68 = arith.constant 0 : index
    %217 = vector.load %arg4[%c1_66, %c0_67, %c0_68] : memref<2x16x64xf32, #tpu.memory_space<vmem>>, vector<1x16x64xf32>
    %218 = vector.shape_cast %217 : vector<1x16x64xf32> to vector<16x64xf32>
    %c1_69 = arith.constant 1 : index
    %c0_70 = arith.constant 0 : index
    %c0_71 = arith.constant 0 : index
    %219 = vector.load %arg5[%c1_69, %c0_70, %c0_71] : memref<2x1x64xf32, #tpu.memory_space<vmem>>, vector<1x1x64xf32>
    %220 = vector.shape_cast %219 : vector<1x1x64xf32> to vector<1x64xf32>
    %c0_72 = arith.constant 0 : index
    %c0_73 = arith.constant 0 : index
    %c0_74 = arith.constant 0 : index
    %221 = vector.load %arg8[%c0_72, %c0_73, %c0_74] : memref<8x8x16xf32, #tpu.memory_space<vmem>>, vector<8x8x16xf32>
    %222 = vector.shape_cast %221 : vector<8x8x16xf32> to vector<64x16xf32>
    %cst_75 = arith.constant dense<0.000000e+00> : vector<64x64xf32>
    %223 = tpu.matmul %222, %216, %cst_75 {dimension_numbers = #tpu.dot_dimension_numbers<[1], [0], [0], [1], [0, 0, 1, 1], [], []>} : vector<64x16xf32>, vector<16x64xf32>, vector<64x64xf32> -> vector<64x64xf32>
    %224 = vector.broadcast %220 : vector<1x64xf32> to vector<64x64xf32>
    %225 = arith.addf %223, %224 : vector<64x64xf32>
    %226 = vector.shape_cast %225 : vector<64x64xf32> to vector<8x8x64xf32>
    %c0_76 = arith.constant 0 : index
    %c0_77 = arith.constant 0 : index
    %c0_78 = arith.constant 0 : index
    %227 = vector.load %arg7[%c0_76, %c0_77, %c0_78] : memref<8x8x64xf32, #tpu.memory_space<vmem>>, vector<8x8x64xf32>
    tpu.vector_store %arg7[%c0_76, %c0_77, %c0_78], %226 {strides = array<i32>} : memref<8x8x64xf32, #tpu.memory_space<vmem>>, vector<8x8x64xf32>,
    %cst_79 = arith.constant 0.000000e+00 : f32
    %228 = vector.broadcast %cst_79 : f32 to vector<8x16xf32>
    %cst_80 = arith.constant 0.000000e+00 : f32
    %229 = vector.broadcast %cst_80 : f32 to vector<8x16xf32>
    %c0_i32_81 = arith.constant 0 : i32
    %230 = arith.index_cast %c0_i32_81 : i32 to index
    %c0_82 = arith.constant 0 : index
    %c0_83 = arith.constant 0 : index
    %231 = vector.load %arg7[%230, %c0_82, %c0_83] : memref<8x8x64xf32, #tpu.memory_space<vmem>>, vector<1x8x64xf32>
    %232 = vector.shape_cast %231 : vector<1x8x64xf32> to vector<8x64xf32>
    %cst_84 = arith.constant dense<0.000000e+00> : vector<8x64xf32>
    %233 = tpu.matmul %228, %218, %cst_84 {dimension_numbers = #tpu.dot_dimension_numbers<[1], [0], [0], [1], [0, 0, 1, 1], [], []>} : vector<8x16xf32>, vector<16x64xf32>, vector<8x64xf32> -> vector<8x64xf32>
    %234 = arith.addf %232, %233 : vector<8x64xf32>
    %235 = vector.extract_strided_slice %234 {offsets = [0, 0], sizes = [8, 48], strides = [1, 1]} : vector<8x64xf32> to vector<8x48xf32>
    %236 = arith.negf %235 : vector<8x48xf32>
    %237 = math.exp %236 : vector<8x48xf32>
    %cst_85 = arith.constant 1.000000e+00 : f32
    %238 = vector.broadcast %cst_85 : f32 to vector<8x48xf32>
    %239 = arith.addf %238, %237 : vector<8x48xf32>
    %240 = arith.divf %238, %239 : vector<8x48xf32>
    %241 = vector.extract_strided_slice %240 {offsets = [0, 0], sizes = [8, 16], strides = [1, 1]} : vector<8x48xf32> to vector<8x16xf32>
    %242 = vector.extract_strided_slice %240 {offsets = [0, 16], sizes = [8, 16], strides = [1, 1]} : vector<8x48xf32> to vector<8x16xf32>
    %243 = vector.extract_strided_slice %240 {offsets = [0, 32], sizes = [8, 16], strides = [1, 1]} : vector<8x48xf32> to vector<8x16xf32>
    %244 = vector.extract_strided_slice %234 {offsets = [0, 48], sizes = [8, 16], strides = [1, 1]} : vector<8x64xf32> to vector<8x16xf32>
    %245 = math.tanh %244 : vector<8x16xf32>
    %246 = arith.mulf %242, %229 : vector<8x16xf32>
    %247 = arith.mulf %241, %245 : vector<8x16xf32>
    %248 = arith.addf %246, %247 : vector<8x16xf32>
    %249 = math.tanh %248 : vector<8x16xf32>
    %250 = arith.mulf %243, %249 : vector<8x16xf32>
    %c1_i32_86 = arith.constant 1 : i32
    %251 = arith.index_cast %c1_i32_86 : i32 to index
    %c0_87 = arith.constant 0 : index
    %c0_88 = arith.constant 0 : index
    %252 = vector.load %arg7[%251, %c0_87, %c0_88] : memref<8x8x64xf32, #tpu.memory_space<vmem>>, vector<1x8x64xf32>
    %253 = vector.shape_cast %252 : vector<1x8x64xf32> to vector<8x64xf32>
    %cst_89 = arith.constant dense<0.000000e+00> : vector<8x64xf32>
    %254 = tpu.matmul %250, %218, %cst_89 {dimension_numbers = #tpu.dot_dimension_numbers<[1], [0], [0], [1], [0, 0, 1, 1], [], []>} : vector<8x16xf32>, vector<16x64xf32>, vector<8x64xf32> -> vector<8x64xf32>
    %255 = arith.addf %253, %254 : vector<8x64xf32>
    %256 = vector.extract_strided_slice %255 {offsets = [0, 0], sizes = [8, 48], strides = [1, 1]} : vector<8x64xf32> to vector<8x48xf32>
    %257 = arith.negf %256 : vector<8x48xf32>
    %258 = math.exp %257 : vector<8x48xf32>
    %cst_90 = arith.constant 1.000000e+00 : f32
    %259 = vector.broadcast %cst_90 : f32 to vector<8x48xf32>
    %260 = arith.addf %259, %258 : vector<8x48xf32>
    %261 = arith.divf %259, %260 : vector<8x48xf32>
    %262 = vector.extract_strided_slice %261 {offsets = [0, 0], sizes = [8, 16], strides = [1, 1]} : vector<8x48xf32> to vector<8x16xf32>
    %263 = vector.extract_strided_slice %261 {offsets = [0, 16], sizes = [8, 16], strides = [1, 1]} : vector<8x48xf32> to vector<8x16xf32>
    %264 = vector.extract_strided_slice %261 {offsets = [0, 32], sizes = [8, 16], strides = [1, 1]} : vector<8x48xf32> to vector<8x16xf32>
    %265 = vector.extract_strided_slice %255 {offsets = [0, 48], sizes = [8, 16], strides = [1, 1]} : vector<8x64xf32> to vector<8x16xf32>
    %266 = math.tanh %265 : vector<8x16xf32>
    %267 = arith.mulf %263, %248 : vector<8x16xf32>
    %268 = arith.mulf %262, %266 : vector<8x16xf32>
    %269 = arith.addf %267, %268 : vector<8x16xf32>
    %270 = math.tanh %269 : vector<8x16xf32>
    %271 = arith.mulf %264, %270 : vector<8x16xf32>
    %c2_i32_91 = arith.constant 2 : i32
    %272 = arith.index_cast %c2_i32_91 : i32 to index
    %c0_92 = arith.constant 0 : index
    %c0_93 = arith.constant 0 : index
    %273 = vector.load %arg7[%272, %c0_92, %c0_93] : memref<8x8x64xf32, #tpu.memory_space<vmem>>, vector<1x8x64xf32>
    %274 = vector.shape_cast %273 : vector<1x8x64xf32> to vector<8x64xf32>
    %cst_94 = arith.constant dense<0.000000e+00> : vector<8x64xf32>
    %275 = tpu.matmul %271, %218, %cst_94 {dimension_numbers = #tpu.dot_dimension_numbers<[1], [0], [0], [1], [0, 0, 1, 1], [], []>} : vector<8x16xf32>, vector<16x64xf32>, vector<8x64xf32> -> vector<8x64xf32>
    %276 = arith.addf %274, %275 : vector<8x64xf32>
    %277 = vector.extract_strided_slice %276 {offsets = [0, 0], sizes = [8, 48], strides = [1, 1]} : vector<8x64xf32> to vector<8x48xf32>
    %278 = arith.negf %277 : vector<8x48xf32>
    %279 = math.exp %278 : vector<8x48xf32>
    %cst_95 = arith.constant 1.000000e+00 : f32
    %280 = vector.broadcast %cst_95 : f32 to vector<8x48xf32>
    %281 = arith.addf %280, %279 : vector<8x48xf32>
    %282 = arith.divf %280, %281 : vector<8x48xf32>
    %283 = vector.extract_strided_slice %282 {offsets = [0, 0], sizes = [8, 16], strides = [1, 1]} : vector<8x48xf32> to vector<8x16xf32>
    %284 = vector.extract_strided_slice %282 {offsets = [0, 16], sizes = [8, 16], strides = [1, 1]} : vector<8x48xf32> to vector<8x16xf32>
    %285 = vector.extract_strided_slice %282 {offsets = [0, 32], sizes = [8, 16], strides = [1, 1]} : vector<8x48xf32> to vector<8x16xf32>
    %286 = vector.extract_strided_slice %276 {offsets = [0, 48], sizes = [8, 16], strides = [1, 1]} : vector<8x64xf32> to vector<8x16xf32>
    %287 = math.tanh %286 : vector<8x16xf32>
    %288 = arith.mulf %284, %269 : vector<8x16xf32>
    %289 = arith.mulf %283, %287 : vector<8x16xf32>
    %290 = arith.addf %288, %289 : vector<8x16xf32>
    %291 = math.tanh %290 : vector<8x16xf32>
    %292 = arith.mulf %285, %291 : vector<8x16xf32>
    %c3_i32_96 = arith.constant 3 : i32
    %293 = arith.index_cast %c3_i32_96 : i32 to index
    %c0_97 = arith.constant 0 : index
    %c0_98 = arith.constant 0 : index
    %294 = vector.load %arg7[%293, %c0_97, %c0_98] : memref<8x8x64xf32, #tpu.memory_space<vmem>>, vector<1x8x64xf32>
    %295 = vector.shape_cast %294 : vector<1x8x64xf32> to vector<8x64xf32>
    %cst_99 = arith.constant dense<0.000000e+00> : vector<8x64xf32>
    %296 = tpu.matmul %292, %218, %cst_99 {dimension_numbers = #tpu.dot_dimension_numbers<[1], [0], [0], [1], [0, 0, 1, 1], [], []>} : vector<8x16xf32>, vector<16x64xf32>, vector<8x64xf32> -> vector<8x64xf32>
    %297 = arith.addf %295, %296 : vector<8x64xf32>
    %298 = vector.extract_strided_slice %297 {offsets = [0, 0], sizes = [8, 48], strides = [1, 1]} : vector<8x64xf32> to vector<8x48xf32>
    %299 = arith.negf %298 : vector<8x48xf32>
    %300 = math.exp %299 : vector<8x48xf32>
    %cst_100 = arith.constant 1.000000e+00 : f32
    %301 = vector.broadcast %cst_100 : f32 to vector<8x48xf32>
    %302 = arith.addf %301, %300 : vector<8x48xf32>
    %303 = arith.divf %301, %302 : vector<8x48xf32>
    %304 = vector.extract_strided_slice %303 {offsets = [0, 0], sizes = [8, 16], strides = [1, 1]} : vector<8x48xf32> to vector<8x16xf32>
    %305 = vector.extract_strided_slice %303 {offsets = [0, 16], sizes = [8, 16], strides = [1, 1]} : vector<8x48xf32> to vector<8x16xf32>
    %306 = vector.extract_strided_slice %303 {offsets = [0, 32], sizes = [8, 16], strides = [1, 1]} : vector<8x48xf32> to vector<8x16xf32>
    %307 = vector.extract_strided_slice %297 {offsets = [0, 48], sizes = [8, 16], strides = [1, 1]} : vector<8x64xf32> to vector<8x16xf32>
    %308 = math.tanh %307 : vector<8x16xf32>
    %309 = arith.mulf %305, %290 : vector<8x16xf32>
    %310 = arith.mulf %304, %308 : vector<8x16xf32>
    %311 = arith.addf %309, %310 : vector<8x16xf32>
    %312 = math.tanh %311 : vector<8x16xf32>
    %313 = arith.mulf %306, %312 : vector<8x16xf32>
    %c4_i32_101 = arith.constant 4 : i32
    %314 = arith.index_cast %c4_i32_101 : i32 to index
    %c0_102 = arith.constant 0 : index
    %c0_103 = arith.constant 0 : index
    %315 = vector.load %arg7[%314, %c0_102, %c0_103] : memref<8x8x64xf32, #tpu.memory_space<vmem>>, vector<1x8x64xf32>
    %316 = vector.shape_cast %315 : vector<1x8x64xf32> to vector<8x64xf32>
    %cst_104 = arith.constant dense<0.000000e+00> : vector<8x64xf32>
    %317 = tpu.matmul %313, %218, %cst_104 {dimension_numbers = #tpu.dot_dimension_numbers<[1], [0], [0], [1], [0, 0, 1, 1], [], []>} : vector<8x16xf32>, vector<16x64xf32>, vector<8x64xf32> -> vector<8x64xf32>
    %318 = arith.addf %316, %317 : vector<8x64xf32>
    %319 = vector.extract_strided_slice %318 {offsets = [0, 0], sizes = [8, 48], strides = [1, 1]} : vector<8x64xf32> to vector<8x48xf32>
    %320 = arith.negf %319 : vector<8x48xf32>
    %321 = math.exp %320 : vector<8x48xf32>
    %cst_105 = arith.constant 1.000000e+00 : f32
    %322 = vector.broadcast %cst_105 : f32 to vector<8x48xf32>
    %323 = arith.addf %322, %321 : vector<8x48xf32>
    %324 = arith.divf %322, %323 : vector<8x48xf32>
    %325 = vector.extract_strided_slice %324 {offsets = [0, 0], sizes = [8, 16], strides = [1, 1]} : vector<8x48xf32> to vector<8x16xf32>
    %326 = vector.extract_strided_slice %324 {offsets = [0, 16], sizes = [8, 16], strides = [1, 1]} : vector<8x48xf32> to vector<8x16xf32>
    %327 = vector.extract_strided_slice %324 {offsets = [0, 32], sizes = [8, 16], strides = [1, 1]} : vector<8x48xf32> to vector<8x16xf32>
    %328 = vector.extract_strided_slice %318 {offsets = [0, 48], sizes = [8, 16], strides = [1, 1]} : vector<8x64xf32> to vector<8x16xf32>
    %329 = math.tanh %328 : vector<8x16xf32>
    %330 = arith.mulf %326, %311 : vector<8x16xf32>
    %331 = arith.mulf %325, %329 : vector<8x16xf32>
    %332 = arith.addf %330, %331 : vector<8x16xf32>
    %333 = math.tanh %332 : vector<8x16xf32>
    %334 = arith.mulf %327, %333 : vector<8x16xf32>
    %c5_i32_106 = arith.constant 5 : i32
    %335 = arith.index_cast %c5_i32_106 : i32 to index
    %c0_107 = arith.constant 0 : index
    %c0_108 = arith.constant 0 : index
    %336 = vector.load %arg7[%335, %c0_107, %c0_108] : memref<8x8x64xf32, #tpu.memory_space<vmem>>, vector<1x8x64xf32>
    %337 = vector.shape_cast %336 : vector<1x8x64xf32> to vector<8x64xf32>
    %cst_109 = arith.constant dense<0.000000e+00> : vector<8x64xf32>
    %338 = tpu.matmul %334, %218, %cst_109 {dimension_numbers = #tpu.dot_dimension_numbers<[1], [0], [0], [1], [0, 0, 1, 1], [], []>} : vector<8x16xf32>, vector<16x64xf32>, vector<8x64xf32> -> vector<8x64xf32>
    %339 = arith.addf %337, %338 : vector<8x64xf32>
    %340 = vector.extract_strided_slice %339 {offsets = [0, 0], sizes = [8, 48], strides = [1, 1]} : vector<8x64xf32> to vector<8x48xf32>
    %341 = arith.negf %340 : vector<8x48xf32>
    %342 = math.exp %341 : vector<8x48xf32>
    %cst_110 = arith.constant 1.000000e+00 : f32
    %343 = vector.broadcast %cst_110 : f32 to vector<8x48xf32>
    %344 = arith.addf %343, %342 : vector<8x48xf32>
    %345 = arith.divf %343, %344 : vector<8x48xf32>
    %346 = vector.extract_strided_slice %345 {offsets = [0, 0], sizes = [8, 16], strides = [1, 1]} : vector<8x48xf32> to vector<8x16xf32>
    %347 = vector.extract_strided_slice %345 {offsets = [0, 16], sizes = [8, 16], strides = [1, 1]} : vector<8x48xf32> to vector<8x16xf32>
    %348 = vector.extract_strided_slice %345 {offsets = [0, 32], sizes = [8, 16], strides = [1, 1]} : vector<8x48xf32> to vector<8x16xf32>
    %349 = vector.extract_strided_slice %339 {offsets = [0, 48], sizes = [8, 16], strides = [1, 1]} : vector<8x64xf32> to vector<8x16xf32>
    %350 = math.tanh %349 : vector<8x16xf32>
    %351 = arith.mulf %347, %332 : vector<8x16xf32>
    %352 = arith.mulf %346, %350 : vector<8x16xf32>
    %353 = arith.addf %351, %352 : vector<8x16xf32>
    %354 = math.tanh %353 : vector<8x16xf32>
    %355 = arith.mulf %348, %354 : vector<8x16xf32>
    %c6_i32_111 = arith.constant 6 : i32
    %356 = arith.index_cast %c6_i32_111 : i32 to index
    %c0_112 = arith.constant 0 : index
    %c0_113 = arith.constant 0 : index
    %357 = vector.load %arg7[%356, %c0_112, %c0_113] : memref<8x8x64xf32, #tpu.memory_space<vmem>>, vector<1x8x64xf32>
    %358 = vector.shape_cast %357 : vector<1x8x64xf32> to vector<8x64xf32>
    %cst_114 = arith.constant dense<0.000000e+00> : vector<8x64xf32>
    %359 = tpu.matmul %355, %218, %cst_114 {dimension_numbers = #tpu.dot_dimension_numbers<[1], [0], [0], [1], [0, 0, 1, 1], [], []>} : vector<8x16xf32>, vector<16x64xf32>, vector<8x64xf32> -> vector<8x64xf32>
    %360 = arith.addf %358, %359 : vector<8x64xf32>
    %361 = vector.extract_strided_slice %360 {offsets = [0, 0], sizes = [8, 48], strides = [1, 1]} : vector<8x64xf32> to vector<8x48xf32>
    %362 = arith.negf %361 : vector<8x48xf32>
    %363 = math.exp %362 : vector<8x48xf32>
    %cst_115 = arith.constant 1.000000e+00 : f32
    %364 = vector.broadcast %cst_115 : f32 to vector<8x48xf32>
    %365 = arith.addf %364, %363 : vector<8x48xf32>
    %366 = arith.divf %364, %365 : vector<8x48xf32>
    %367 = vector.extract_strided_slice %366 {offsets = [0, 0], sizes = [8, 16], strides = [1, 1]} : vector<8x48xf32> to vector<8x16xf32>
    %368 = vector.extract_strided_slice %366 {offsets = [0, 16], sizes = [8, 16], strides = [1, 1]} : vector<8x48xf32> to vector<8x16xf32>
    %369 = vector.extract_strided_slice %366 {offsets = [0, 32], sizes = [8, 16], strides = [1, 1]} : vector<8x48xf32> to vector<8x16xf32>
    %370 = vector.extract_strided_slice %360 {offsets = [0, 48], sizes = [8, 16], strides = [1, 1]} : vector<8x64xf32> to vector<8x16xf32>
    %371 = math.tanh %370 : vector<8x16xf32>
    %372 = arith.mulf %368, %353 : vector<8x16xf32>
    %373 = arith.mulf %367, %371 : vector<8x16xf32>
    %374 = arith.addf %372, %373 : vector<8x16xf32>
    %375 = math.tanh %374 : vector<8x16xf32>
    %376 = arith.mulf %369, %375 : vector<8x16xf32>
    %c7_i32_116 = arith.constant 7 : i32
    %377 = arith.index_cast %c7_i32_116 : i32 to index
    %c0_117 = arith.constant 0 : index
    %c0_118 = arith.constant 0 : index
    %378 = vector.load %arg7[%377, %c0_117, %c0_118] : memref<8x8x64xf32, #tpu.memory_space<vmem>>, vector<1x8x64xf32>
    %379 = vector.shape_cast %378 : vector<1x8x64xf32> to vector<8x64xf32>
    %cst_119 = arith.constant dense<0.000000e+00> : vector<8x64xf32>
    %380 = tpu.matmul %376, %218, %cst_119 {dimension_numbers = #tpu.dot_dimension_numbers<[1], [0], [0], [1], [0, 0, 1, 1], [], []>} : vector<8x16xf32>, vector<16x64xf32>, vector<8x64xf32> -> vector<8x64xf32>
    %381 = arith.addf %379, %380 : vector<8x64xf32>
    %382 = vector.extract_strided_slice %381 {offsets = [0, 0], sizes = [8, 48], strides = [1, 1]} : vector<8x64xf32> to vector<8x48xf32>
    %383 = arith.negf %382 : vector<8x48xf32>
    %384 = math.exp %383 : vector<8x48xf32>
    %cst_120 = arith.constant 1.000000e+00 : f32
    %385 = vector.broadcast %cst_120 : f32 to vector<8x48xf32>
    %386 = arith.addf %385, %384 : vector<8x48xf32>
    %387 = arith.divf %385, %386 : vector<8x48xf32>
    %388 = vector.extract_strided_slice %387 {offsets = [0, 0], sizes = [8, 16], strides = [1, 1]} : vector<8x48xf32> to vector<8x16xf32>
    %389 = vector.extract_strided_slice %387 {offsets = [0, 16], sizes = [8, 16], strides = [1, 1]} : vector<8x48xf32> to vector<8x16xf32>
    %390 = vector.extract_strided_slice %387 {offsets = [0, 32], sizes = [8, 16], strides = [1, 1]} : vector<8x48xf32> to vector<8x16xf32>
    %391 = vector.extract_strided_slice %381 {offsets = [0, 48], sizes = [8, 16], strides = [1, 1]} : vector<8x64xf32> to vector<8x16xf32>
    %392 = math.tanh %391 : vector<8x16xf32>
    %393 = arith.mulf %389, %374 : vector<8x16xf32>
    %394 = arith.mulf %388, %392 : vector<8x16xf32>
    %395 = arith.addf %393, %394 : vector<8x16xf32>
    %396 = math.tanh %395 : vector<8x16xf32>
    %397 = arith.mulf %390, %396 : vector<8x16xf32>
    %c8_i32_121 = arith.constant 8 : i32
    %c0_122 = arith.constant 0 : index
    %c0_123 = arith.constant 0 : index
    %398 = vector.load %arg2[%c0_122, %c0_123] : memref<8x16xf32, #tpu.memory_space<vmem>>, vector<8x16xf32>
    "tpu.trace_start"() <{level = 10 : i32, message = "bd,md->bm"}> : () -> ()
    %cst_124 = arith.constant dense<0.000000e+00> : vector<8x8xf32>
    %399 = tpu.matmul %397, %398, %cst_124 {dimension_numbers = #tpu.dot_dimension_numbers<[1], [1], [0], [0], [0, 0, 1, 0], [], []>} : vector<8x16xf32>, vector<8x16xf32>, vector<8x8xf32> -> vector<8x8xf32>
    "tpu.trace_stop"() : () -> ()
    %400 = arith.mulf %397, %397 : vector<8x16xf32>
    %cst_125 = arith.constant dense<0.000000e+00> : vector<8xf32>
    %401 = vector.multi_reduction <add>, %400, %cst_125 [1] : vector<8x16xf32> to vector<8xf32>
    %402 = vector.shape_cast %401 : vector<8xf32> to vector<8x1xf32>
    %403 = arith.mulf %398, %398 : vector<8x16xf32>
    %cst_126 = arith.constant dense<0.000000e+00> : vector<8xf32>
    %404 = vector.multi_reduction <add>, %403, %cst_126 [1] : vector<8x16xf32> to vector<8xf32>
    %405 = vector.shape_cast %404 : vector<8xf32> to vector<8x1xf32>
    %cst_127 = arith.constant 2.000000e+00 : f32
    %406 = vector.broadcast %cst_127 : f32 to vector<8x8xf32>
    %407 = arith.mulf %406, %399 : vector<8x8xf32>
    %408 = vector.broadcast %402 : vector<8x1xf32> to vector<8x8xf32>
    %409 = arith.subf %407, %408 : vector<8x8xf32>
    %410 = tpu.transpose %405, [1, 0] : vector<8x1xf32> -> vector<1x8xf32>
    %411 = vector.broadcast %410 : vector<1x8xf32> to vector<8x8xf32>
    %412 = arith.subf %409, %411 : vector<8x8xf32>
    %c0_128 = arith.constant 0 : index
    %c0_129 = arith.constant 0 : index
    %413 = vector.load %arg6[%c0_128, %c0_129] : memref<8x8xf32, #tpu.memory_space<vmem>>, vector<8x8xf32>
    tpu.vector_store %arg6[%c0_128, %c0_129], %412 {strides = array<i32>} : memref<8x8xf32, #tpu.memory_space<vmem>>, vector<8x8xf32>,
    return
  }
  func.func @transform_0(%arg0: i32) -> (i32, i32, i32) {
    %c0_i32 = arith.constant 0 : i32
    %c0_i32_0 = arith.constant 0 : i32
    %c0_i32_1 = arith.constant 0 : i32
    return %c0_i32, %arg0, %c0_i32_0 : i32, i32, i32
  }
  func.func @transform_1(%arg0: i32) -> (i32, i32) {
    %c0_i32 = arith.constant 0 : i32
    %c0_i32_0 = arith.constant 0 : i32
    %c0_i32_1 = arith.constant 0 : i32
    return %c0_i32, %c0_i32_0 : i32, i32
  }
  func.func @transform_2(%arg0: i32) -> (i32, i32, i32) {
    %c0_i32 = arith.constant 0 : i32
    %c0_i32_0 = arith.constant 0 : i32
    %c0_i32_1 = arith.constant 0 : i32
    %c0_i32_2 = arith.constant 0 : i32
    return %c0_i32, %c0_i32_0, %c0_i32_1 : i32, i32, i32
  }
  func.func @transform_3(%arg0: i32) -> (i32, i32, i32) {
    %c0_i32 = arith.constant 0 : i32
    %c0_i32_0 = arith.constant 0 : i32
    %c0_i32_1 = arith.constant 0 : i32
    %c0_i32_2 = arith.constant 0 : i32
    return %c0_i32, %c0_i32_0, %c0_i32_1 : i32, i32, i32
  }
  func.func @transform_4(%arg0: i32) -> (i32, i32, i32) {
    %c0_i32 = arith.constant 0 : i32
    %c0_i32_0 = arith.constant 0 : i32
    %c0_i32_1 = arith.constant 0 : i32
    %c0_i32_2 = arith.constant 0 : i32
    return %c0_i32, %c0_i32_0, %c0_i32_1 : i32, i32, i32
  }
  func.func @transform_5(%arg0: i32) -> (i32, i32) {
    %c0_i32 = arith.constant 0 : i32
    %c0_i32_0 = arith.constant 0 : i32
    return %arg0, %c0_i32 : i32, i32
  }
}

</mosaic_0001>

<llo_original>
// kernel: tpu_custom_call.1
$region0: #{tpu_custom_call.1}
  #allocation0 [shape = 'u32[]', space=smem, size = 0x4, offset = 0x4, fixed_abs, tag = 'smem constant byte address 0x4 - core index']
  #allocation1 [shape = 'u32[144,128]{1,0:T(1,128)}', space=vmem, size = 0x12000, scoped, tag = 'internal scratch']
  #allocation2 [shape = 'f32[8,8,64]{2,1,0:T(8,128)}', space=vmem, size = 0x8000, scoped, tag = 'scratch operand']
  #allocation3 [shape = 'f32[8,8,16]{2,1,0:T(8,128)}', space=vmem, size = 0x8000, scoped, tag = 'scratch operand']
  %s0 = inlined_call_operand.hbm [shape: f32[8,8,16], index: 0, kind: input, shape index: {}]
  %s1 = inlined_call_operand.hbm [shape: f32[8,16], index: 1, kind: input, shape index: {}]
  %s2 = inlined_call_operand.hbm [shape: f32[2,16,64], index: 2, kind: input, shape index: {}]
  %s3 = inlined_call_operand.hbm [shape: f32[2,16,64], index: 3, kind: input, shape index: {}]
  %s4 = inlined_call_operand.vmem [shape: f32[2,1,64], index: 4, kind: input, shape index: {}]
  %s5 = inlined_call_operand.hbm [shape: f32[8,8], index: 5, kind: output, shape index: {}]
  %s6 = sld [smem:[#allocation0]]
  $region46: #{tpu_custom_call.1} parent=0
    _
  %s8 = ssub.s32 1, %s6
  %s9 = scalar_select 0, %s8, %s6
  $region1: #{tpu_custom_call.1} parent=0
    #allocation4 [shape = 'u8[32768]{0}', space=vmem, size = 0x8000, scoped, tag = 'input window, operand 0, single buffered']
    #allocation5 [shape = 's32[1]{0}', space=sflag, size = 0x4, scoped, tag = 'scoped memory for tpu_custom_call.1']
    #allocation6 [shape = 's32[1]{0}', space=sflag, size = 0x4, scoped, tag = 'scoped memory for tpu_custom_call.1']
    #allocation7 [shape = 'u8[4096]{0}', space=vmem, size = 0x1000, scoped, tag = 'input window, operand 1, single buffered']
    #allocation8 [shape = 's32[1]{0}', space=sflag, size = 0x4, scoped, tag = 'scoped memory for tpu_custom_call.1']
    #allocation9 [shape = 'u8[16384]{0}', space=vmem, size = 0x4000, scoped, tag = 'input window, operand 2, single buffered']
    #allocation10 [shape = 'u8[16384]{0}', space=vmem, size = 0x4000, scoped, tag = 'input window, operand 3, single buffered']
    #allocation11 [shape = 's32[1]{0}', space=sflag, size = 0x4, scoped, tag = 'scoped memory for tpu_custom_call.1']
    #allocation12 [shape = 'u8[4096]{0}', space=vmem, size = 0x1000, scoped, tag = 'output window, operand 0, single buffered']
    %10 = vsyncpa [#allocation5], 0
    %11 = vsyncpa [#allocation8], 0
    %12 = vsyncpa [#allocation11], 0
    %13 = vsyncpa [#allocation6], 0
    // Predicated region
    $region2: #{tpu_custom_call.1} parent=1 // pred_check
      _
    $region3: #{tpu_custom_call.1} parent=1 // pred_check_branch
      %15 = sbr.rel (0) target = $region5
    $region4: #{tpu_custom_call.1} parent=1 // pred_region
      %s17 = ssub.s32 1024, 1024
      %18 = vsyncadd [#allocation5], %s17
      %s19 = sshll.u32 [#allocation4], 4
      %s20 = int_to_ptr.vmem [resolvable:$true] %s19
      %25 = dma.hbm_to_vmem [thread:$0]  %s0, 1024, %s20, [#allocation5], 128, 128, 8
    $region5: #{tpu_custom_call.1} parent=1 // pred_fallthru
      _
    // Predicated region
    $region6: #{tpu_custom_call.1} parent=1 // pred_check
      _
    $region7: #{tpu_custom_call.1} parent=1 // pred_check_branch
      %27 = sbr.rel (0) target = $region9
    $region8: #{tpu_custom_call.1} parent=1 // pred_region
      %s29 = ssub.s32 128, 128
      %30 = vsyncadd [#allocation8], %s29
      %s32 = sshll.u32 [#allocation7], 4
      %s33 = int_to_ptr.vmem [resolvable:$true] %s32
      %35 = dma.hbm_to_vmem [thread:$0]  %s1, 128, %s33, [#allocation8]
    $region9: #{tpu_custom_call.1} parent=1 // pred_fallthru
      _
    // Predicated region
    $region10: #{tpu_custom_call.1} parent=1 // pred_check
      _
    $region11: #{tpu_custom_call.1} parent=1 // pred_check_branch
      %37 = sbr.rel (0) target = $region13
    $region12: #{tpu_custom_call.1} parent=1 // pred_region
      %s39 = ssub.s32 512, 512
      %40 = vsyncadd [#allocation8], %s39
      %s41 = sshll.u32 [#allocation9], 4
      %s42 = int_to_ptr.vmem [resolvable:$true] %s41
      %47 = dma.hbm_to_vmem [thread:$0]  %s2, 512, %s42, [#allocation8], 128, 128, 8
    $region13: #{tpu_custom_call.1} parent=1 // pred_fallthru
      _
    // Predicated region
    $region14: #{tpu_custom_call.1} parent=1 // pred_check
      _
    $region15: #{tpu_custom_call.1} parent=1 // pred_check_branch
      %49 = sbr.rel (0) target = $region17
    $region16: #{tpu_custom_call.1} parent=1 // pred_region
      %s51 = ssub.s32 512, 512
      %52 = vsyncadd [#allocation11], %s51
      %s53 = sshll.u32 [#allocation10], 4
      %s54 = int_to_ptr.vmem [resolvable:$true] %s53
      %59 = dma.hbm_to_vmem [thread:$0]  %s3, 512, %s54, [#allocation11], 128, 128, 8
    $region17: #{tpu_custom_call.1} parent=1 // pred_fallthru
      _
    // Predicated region
    $region18: #{tpu_custom_call.1} parent=1 // pred_check
      _
    $region19: #{tpu_custom_call.1} parent=1 // pred_check_branch
      %61 = sbr.rel (0) target = $region21
    $region20: #{tpu_custom_call.1} parent=1 // pred_region
      _
    $region21: #{tpu_custom_call.1} parent=1 // pred_fallthru
      _
    // Predicated region
    $region22: #{tpu_custom_call.1} parent=1 // pred_check
      _
    $region23: #{tpu_custom_call.1} parent=1 // pred_check_branch
      %63 = sbr.rel (0) target = $region25
    $region24: #{tpu_custom_call.1} parent=1 // pred_region
      %64 = dma.done [#allocation5], 1024
    $region25: #{tpu_custom_call.1} parent=1 // pred_fallthru
      _
    // Predicated region
    $region26: #{tpu_custom_call.1} parent=1 // pred_check
      _
    $region27: #{tpu_custom_call.1} parent=1 // pred_check_branch
      %66 = sbr.rel (0) target = $region29
    $region28: #{tpu_custom_call.1} parent=1 // pred_region
      %67 = dma.done [#allocation8], 128
    $region29: #{tpu_custom_call.1} parent=1 // pred_fallthru
      _
    // Predicated region
    $region30: #{tpu_custom_call.1} parent=1 // pred_check
      _
    $region31: #{tpu_custom_call.1} parent=1 // pred_check_branch
      %69 = sbr.rel (0) target = $region33
    $region32: #{tpu_custom_call.1} parent=1 // pred_region
      %70 = dma.done [#allocation8], 512
    $region33: #{tpu_custom_call.1} parent=1 // pred_fallthru
      _
    // Predicated region
    $region34: #{tpu_custom_call.1} parent=1 // pred_check
      _
    $region35: #{tpu_custom_call.1} parent=1 // pred_check_branch
      %72 = sbr.rel (0) target = $region37
    $region36: #{tpu_custom_call.1} parent=1 // pred_region
      %73 = dma.done [#allocation11], 512
    $region37: #{tpu_custom_call.1} parent=1 // pred_fallthru
      _
    %v74 = vld [vmem:[#allocation4] sm:$0xff]
    %v75 = vld [vmem:[#allocation4 + $0x8] sm:$0xff]
    %v76 = vld [vmem:[#allocation4 + $0x10] sm:$0xff]
    %v77 = vld [vmem:[#allocation4 + $0x18] sm:$0xff]
    %v78 = vld [vmem:[#allocation4 + $0x20] sm:$0xff]
    %v79 = vld [vmem:[#allocation4 + $0x28] sm:$0xff]
    %v80 = vld [vmem:[#allocation4 + $0x30] sm:$0xff]
    %v81 = vld [vmem:[#allocation4 + $0x38] sm:$0xff]
    %v82 = vld [vmem:[#allocation9] sm:$0xff]
    %v83 = vld [vmem:[#allocation9 + $0x8] sm:$0xff]
    %v84 = vld [vmem:[#allocation10] sm:$0xff]
    %v85 = vld [vmem:[#allocation10 + $0x8] sm:$0xff]
    %v86 = vld [vmem:[%s4] sm:$0x1]
    %v88 = vlaneseq
    %v89 = vshrl.u32 %v88, 7
    %v90 = vsub.s32 0, %v89
    %v91 = vrot.slane %v86, %v90
    %vm93 = vcmask 130048
    %v95 = vsel %vm93, %v74, 0
    %v98 = vsel %vm93, %v75, 0
    %v101 = vsel %vm93, %v76, 0
    %v104 = vsel %vm93, %v77, 0
    %v107 = vsel %vm93, %v78, 0
    %v110 = vsel %vm93, %v79, 0
    %v113 = vsel %vm93, %v80, 0
    %v116 = vsel %vm93, %v81, 0
    %118 = vmatprep.subr.mxu0 0.0
    %119 = vmatpush1.msra.mxu0 %v82
    %120 = vmatprep.subr.mxu0 0.0
    %121 = vmatpush1.msra.mxu0 %v83
    %122 = vmatprep.subr.mxu0 0.0
    %123 = vmatpush1.msra.mxu0 0.0
    %124 = vmatprep.subr.mxu0 0.0
    %125 = vmatpush1.msra.mxu0 0.0
    %126 = vmatprep.subr.mxu0 0.0
    %127 = vmatpush1.msra.mxu0 0.0
    %128 = vmatprep.subr.mxu0 0.0
    %129 = vmatpush1.msra.mxu0 0.0
    %130 = vmatprep.subr.mxu0 0.0
    %131 = vmatpush1.msra.mxu0 0.0
    %132 = vmatprep.subr.mxu0 0.0
    %133 = vmatpush1.msra.mxu0 0.0
    %134 = vmatprep.subr.mxu0 0.0
    %135 = vmatpush1.msra.mxu0 0.0
    %136 = vmatprep.subr.mxu0 0.0
    %137 = vmatpush1.msra.mxu0 0.0
    %138 = vmatprep.subr.mxu0 0.0
    %139 = vmatpush1.msra.mxu0 0.0
    %140 = vmatprep.subr.mxu0 0.0
    %141 = vmatpush1.msra.mxu0 0.0
    %142 = vmatprep.subr.mxu0 0.0
    %143 = vmatpush1.msra.mxu0 0.0
    %144 = vmatprep.subr.mxu0 0.0
    %145 = vmatpush1.msra.mxu0 0.0
    %146 = vmatprep.subr.mxu0 0.0
    %147 = vmatpush1.msra.mxu0 0.0
    %148 = vmatprep.subr.mxu0 0.0
    %149 = vmatpush1.msra.mxu0 0.0
    %150 = vmatprep.subr.mxu0 0.0
    %151 = vmatpush1.msra.mxu0 0.0
    %152 = vmatprep.subr.mxu0 0.0
    %153 = vmatpush1.msra.mxu0 0.0
    %154 = vmatprep.subr.mxu0 0.0
    %155 = vmatpush1.msra.mxu0 0.0
    %156 = vmatprep.subr.mxu0 0.0
    %157 = vmatpush1.msra.mxu0 0.0
    %158 = vmatprep.subr.mxu0 0.0
    %159 = vmatpush1.msra.mxu0 0.0
    %160 = vmatprep.subr.mxu0 0.0
    %161 = vmatpush1.msra.mxu0 0.0
    %162 = vmatprep.subr.mxu0 0.0
    %163 = vmatpush1.msra.mxu0 0.0
    %164 = vmatprep.subr.mxu0 0.0
    %165 = vmatpush1.msra.mxu0 0.0
    %166 = vmatprep.subr.mxu0 0.0
    %167 = vmatpush1.msra.mxu0 0.0
    %168 = vmatprep.subr.mxu0 0.0
    %169 = vmatpush1.msra.mxu0 0.0
    %170 = vmatprep.subr.mxu0 0.0
    %171 = vmatpush1.msra.mxu0 0.0
    %172 = vmatprep.subr.mxu0 0.0
    %173 = vmatpush1.msra.mxu0 0.0
    %174 = vmatprep.subr.mxu0 0.0
    %175 = vmatpush1.msra.mxu0 0.0
    %176 = vmatprep.subr.mxu0 0.0
    %177 = vmatpush1.msra.mxu0 0.0
    %178 = vmatprep.subr.mxu0 0.0
    %179 = vmatpush1.msra.mxu0 0.0
    %180 = vmatprep.subr.mxu0 0.0
    %181 = vmatpush1.msra.mxu0 0.0
    %182 = vmatprep.mubr.f32.mxu0 0.0
    %183 = vmatmul.mubr.f32.gmra.mrb[0].mxu0 %v95
    %v184 = vpop.f32.mrb[0].mxu0
    %v185 = vadd.f32 %v91, %v184
    %v186 = vpop.f32.mrb[0].mxu0
    %187 = vmatprep.mubr.f32.mxu0 0.0
    %188 = vmatmul.mubr.f32.gmra.mrb[0].mxu0 %v98
    %v189 = vpop.f32.mrb[0].mxu0
    %v190 = vadd.f32 %v91, %v189
    %v191 = vpop.f32.mrb[0].mxu0
    %192 = vmatprep.mubr.f32.mxu0 0.0
    %193 = vmatmul.mubr.f32.gmra.mrb[0].mxu0 %v101
    %v194 = vpop.f32.mrb[0].mxu0
    %v195 = vadd.f32 %v91, %v194
    %v196 = vpop.f32.mrb[0].mxu0
    %197 = vmatprep.mubr.f32.mxu0 0.0
    %198 = vmatmul.mubr.f32.gmra.mrb[0].mxu0 %v104
    %v199 = vpop.f32.mrb[0].mxu0
    %v200 = vadd.f32 %v91, %v199
    %v201 = vpop.f32.mrb[0].mxu0
    %202 = vmatprep.mubr.f32.mxu0 0.0
    %203 = vmatmul.mubr.f32.gmra.mrb[0].mxu0 %v107
    %v204 = vpop.f32.mrb[0].mxu0
    %v205 = vadd.f32 %v91, %v204
    %v206 = vpop.f32.mrb[0].mxu0
    %207 = vmatprep.mubr.f32.mxu0 0.0
    %208 = vmatmul.mubr.f32.gmra.mrb[0].mxu0 %v110
    %v209 = vpop.f32.mrb[0].mxu0
    %v210 = vadd.f32 %v91, %v209
    %v211 = vpop.f32.mrb[0].mxu0
    %212 = vmatprep.mubr.f32.mxu0 0.0
    %213 = vmatmul.mubr.f32.gmra.mrb[0].mxu0 %v113
    %v214 = vpop.f32.mrb[0].mxu0
    %v215 = vadd.f32 %v91, %v214
    %v216 = vpop.f32.mrb[0].mxu0
    %217 = vmatprep.mubr.f32.mxu0 0.0
    %218 = vmatmul.mubr.f32.gmra.mrb[0].mxu0 %v116
    %v219 = vpop.f32.mrb[0].mxu0
    %v220 = vadd.f32 %v91, %v219
    %v221 = vpop.f32.mrb[0].mxu0
    %222 = vdwg.mxu0
    %vm223 = vcmask 523264
    %224 = vst.msk [vmem:[#allocation2] sm:$0xff] %vm223, %v185
    %225 = vst.msk [vmem:[#allocation2 + $0x8] sm:$0xff] %vm223, %v190
    %226 = vst.msk [vmem:[#allocation2 + $0x10] sm:$0xff] %vm223, %v195
    %227 = vst.msk [vmem:[#allocation2 + $0x18] sm:$0xff] %vm223, %v200
    %228 = vst.msk [vmem:[#allocation2 + $0x20] sm:$0xff] %vm223, %v205
    %229 = vst.msk [vmem:[#allocation2 + $0x28] sm:$0xff] %vm223, %v210
    %230 = vst.msk [vmem:[#allocation2 + $0x30] sm:$0xff] %vm223, %v215
    %231 = vst.msk [vmem:[#allocation2 + $0x38] sm:$0xff] %vm223, %v220
    %v232 = vld [vmem:[#allocation2] sm:$0xff]
    %v234 = vsel %vm93, 0.0, 0
    %236 = vmatprep.subr.mxu0 0.0
    %237 = vmatpush1.msra.mxu0 %v84
    %238 = vmatprep.subr.mxu0 0.0
    %239 = vmatpush1.msra.mxu0 %v85
    %240 = vmatprep.subr.mxu0 0.0
    %241 = vmatpush1.msra.mxu0 0.0
    %242 = vmatprep.subr.mxu0 0.0
    %243 = vmatpush1.msra.mxu0 0.0
    %244 = vmatprep.subr.mxu0 0.0
    %245 = vmatpush1.msra.mxu0 0.0
    %246 = vmatprep.subr.mxu0 0.0
    %247 = vmatpush1.msra.mxu0 0.0
    %248 = vmatprep.subr.mxu0 0.0
    %249 = vmatpush1.msra.mxu0 0.0
    %250 = vmatprep.subr.mxu0 0.0
    %251 = vmatpush1.msra.mxu0 0.0
    %252 = vmatprep.subr.mxu0 0.0
    %253 = vmatpush1.msra.mxu0 0.0
    %254 = vmatprep.subr.mxu0 0.0
    %255 = vmatpush1.msra.mxu0 0.0
    %256 = vmatprep.subr.mxu0 0.0
    %257 = vmatpush1.msra.mxu0 0.0
    %258 = vmatprep.subr.mxu0 0.0
    %259 = vmatpush1.msra.mxu0 0.0
    %260 = vmatprep.subr.mxu0 0.0
    %261 = vmatpush1.msra.mxu0 0.0
    %262 = vmatprep.subr.mxu0 0.0
    %263 = vmatpush1.msra.mxu0 0.0
    %264 = vmatprep.subr.mxu0 0.0
    %265 = vmatpush1.msra.mxu0 0.0
    %266 = vmatprep.subr.mxu0 0.0
    %267 = vmatpush1.msra.mxu0 0.0
    %268 = vmatprep.subr.mxu0 0.0
    %269 = vmatpush1.msra.mxu0 0.0
    %270 = vmatprep.subr.mxu0 0.0
    %271 = vmatpush1.msra.mxu0 0.0
    %272 = vmatprep.subr.mxu0 0.0
    %273 = vmatpush1.msra.mxu0 0.0
    %274 = vmatprep.subr.mxu0 0.0
    %275 = vmatpush1.msra.mxu0 0.0
    %276 = vmatprep.subr.mxu0 0.0
    %277 = vmatpush1.msra.mxu0 0.0
    %278 = vmatprep.subr.mxu0 0.0
    %279 = vmatpush1.msra.mxu0 0.0
    %280 = vmatprep.subr.mxu0 0.0
    %281 = vmatpush1.msra.mxu0 0.0
    %282 = vmatprep.subr.mxu0 0.0
    %283 = vmatpush1.msra.mxu0 0.0
    %284 = vmatprep.subr.mxu0 0.0
    %285 = vmatpush1.msra.mxu0 0.0
    %286 = vmatprep.subr.mxu0 0.0
    %287 = vmatpush1.msra.mxu0 0.0
    %288 = vmatprep.subr.mxu0 0.0
    %289 = vmatpush1.msra.mxu0 0.0
    %290 = vmatprep.subr.mxu0 0.0
    %291 = vmatpush1.msra.mxu0 0.0
    %292 = vmatprep.subr.mxu0 0.0
    %293 = vmatpush1.msra.mxu0 0.0
    %294 = vmatprep.subr.mxu0 0.0
    %295 = vmatpush1.msra.mxu0 0.0
    %296 = vmatprep.subr.mxu0 0.0
    %297 = vmatpush1.msra.mxu0 0.0
    %298 = vmatprep.subr.mxu0 0.0
    %299 = vmatpush1.msra.mxu0 0.0
    %300 = vmatprep.mubr.f32.mxu0 0.0
    %301 = vmatmul.mubr.f32.gmra.mrb[0].mxu0 %v234
    %v302 = vpop.f32.mrb[0].mxu0
    %v303 = vadd.f32 0.0, %v302
    %v304 = vpop.f32.mrb[0].mxu0
    %305 = vdwg.mxu0
    %v306 = vadd.f32 %v232, %v303
    %v307 = vxor.u32 %v306, 2147483648
    %v308 = vmul.f32 %v307, 1.442695
    %v309 = vpow.pop %v308
    %v310 = vadd.f32 %v309, 1.0
    %v311 = vrcp.pop %v310
    %v312 = vmul.f32 1.0, %v311
    %v313 = vtanh.pop %v306
    %v314 = vmul.f32 %v312, 0.0
    %316 = vrot.lane.b32.xlu0 %v313, 80
    %v317 = vpop.permute.xlu0 %316
    %v319 = vmul.f32 %v312, %v317
    %321 = vrot.lane.b32.xlu0 %v319, 16
    %v322 = vpop.permute.xlu0 %321
    %v324 = vadd.f32 %v314, %v322
    %v325 = vtanh.pop %v324
    %327 = vrot.lane.b32.xlu0 %v325, 16
    %v328 = vpop.permute.xlu0 %327
    %v330 = vmul.f32 %v312, %v328
    %332 = vrot.lane.b32.xlu0 %v330, 96
    %v333 = vpop.permute.xlu0 %332
    %335 = vst.msk [vmem:[#allocation3] sm:$0xff] %vm93, %v333
    %s336 = scalar_lea.vmem [#allocation2], 8
    %v337 = vld [vmem:[%s336] sm:$0xff]
    %v338 = vsel %vm93, %v333, 0
    %340 = vmatprep.subr.mxu0 0.0
    %341 = vmatpush1.msra.mxu0 %v84
    %342 = vmatprep.subr.mxu0 0.0
    %343 = vmatpush1.msra.mxu0 %v85
    %344 = vmatprep.subr.mxu0 0.0
    %345 = vmatpush1.msra.mxu0 0.0
    %346 = vmatprep.subr.mxu0 0.0
    %347 = vmatpush1.msra.mxu0 0.0
    %348 = vmatprep.subr.mxu0 0.0
    %349 = vmatpush1.msra.mxu0 0.0
    %350 = vmatprep.subr.mxu0 0.0
    %351 = vmatpush1.msra.mxu0 0.0
    %352 = vmatprep.subr.mxu0 0.0
    %353 = vmatpush1.msra.mxu0 0.0
    %354 = vmatprep.subr.mxu0 0.0
    %355 = vmatpush1.msra.mxu0 0.0
    %356 = vmatprep.subr.mxu0 0.0
    %357 = vmatpush1.msra.mxu0 0.0
    %358 = vmatprep.subr.mxu0 0.0
    %359 = vmatpush1.msra.mxu0 0.0
    %360 = vmatprep.subr.mxu0 0.0
    %361 = vmatpush1.msra.mxu0 0.0
    %362 = vmatprep.subr.mxu0 0.0
    %363 = vmatpush1.msra.mxu0 0.0
    %364 = vmatprep.subr.mxu0 0.0
    %365 = vmatpush1.msra.mxu0 0.0
    %366 = vmatprep.subr.mxu0 0.0
    %367 = vmatpush1.msra.mxu0 0.0
    %368 = vmatprep.subr.mxu0 0.0
    %369 = vmatpush1.msra.mxu0 0.0
    %370 = vmatprep.subr.mxu0 0.0
    %371 = vmatpush1.msra.mxu0 0.0
    %372 = vmatprep.subr.mxu0 0.0
    %373 = vmatpush1.msra.mxu0 0.0
    %374 = vmatprep.subr.mxu0 0.0
    %375 = vmatpush1.msra.mxu0 0.0
    %376 = vmatprep.subr.mxu0 0.0
    %377 = vmatpush1.msra.mxu0 0.0
    %378 = vmatprep.subr.mxu0 0.0
    %379 = vmatpush1.msra.mxu0 0.0
    %380 = vmatprep.subr.mxu0 0.0
    %381 = vmatpush1.msra.mxu0 0.0
    %382 = vmatprep.subr.mxu0 0.0
    %383 = vmatpush1.msra.mxu0 0.0
    %384 = vmatprep.subr.mxu0 0.0
    %385 = vmatpush1.msra.mxu0 0.0
    %386 = vmatprep.subr.mxu0 0.0
    %387 = vmatpush1.msra.mxu0 0.0
    %388 = vmatprep.subr.mxu0 0.0
    %389 = vmatpush1.msra.mxu0 0.0
    %390 = vmatprep.subr.mxu0 0.0
    %391 = vmatpush1.msra.mxu0 0.0
    %392 = vmatprep.subr.mxu0 0.0
    %393 = vmatpush1.msra.mxu0 0.0
    %394 = vmatprep.subr.mxu0 0.0
    %395 = vmatpush1.msra.mxu0 0.0
    %396 = vmatprep.subr.mxu0 0.0
    %397 = vmatpush1.msra.mxu0 0.0
    %398 = vmatprep.subr.mxu0 0.0
    %399 = vmatpush1.msra.mxu0 0.0
    %400 = vmatprep.subr.mxu0 0.0
    %401 = vmatpush1.msra.mxu0 0.0
    %402 = vmatprep.subr.mxu0 0.0
    %403 = vmatpush1.msra.mxu0 0.0
    %404 = vmatprep.mubr.f32.mxu0 0.0
    %405 = vmatmul.mubr.f32.gmra.mrb[0].mxu0 %v338
    %v406 = vpop.f32.mrb[0].mxu0
    %v407 = vadd.f32 0.0, %v406
    %v408 = vpop.f32.mrb[0].mxu0
    %409 = vdwg.mxu0
    %v410 = vadd.f32 %v337, %v407
    %v411 = vxor.u32 %v410, 2147483648
    %v412 = vmul.f32 %v411, 1.442695
    %v413 = vpow.pop %v412
    %v414 = vadd.f32 %v413, 1.0
    %v415 = vrcp.pop %v414
    %v416 = vmul.f32 1.0, %v415
    %v417 = vtanh.pop %v410
    %v418 = vmul.f32 %v416, %v324
    %420 = vrot.lane.b32.xlu0 %v417, 80
    %v421 = vpop.permute.xlu0 %420
    %v423 = vmul.f32 %v416, %v421
    %425 = vrot.lane.b32.xlu0 %v423, 16
    %v426 = vpop.permute.xlu0 %425
    %v428 = vadd.f32 %v418, %v426
    %v429 = vtanh.pop %v428
    %431 = vrot.lane.b32.xlu0 %v429, 16
    %v432 = vpop.permute.xlu0 %431
    %v434 = vmul.f32 %v416, %v432
    %436 = vrot.lane.b32.xlu0 %v434, 96
    %v437 = vpop.permute.xlu0 %436
    %s439 = scalar_lea.vmem [#allocation3], 8
    %440 = vst.msk [vmem:[%s439] sm:$0xff] %vm93, %v437
    %s441 = scalar_lea.vmem [#allocation2], 16
    %v442 = vld [vmem:[%s441] sm:$0xff]
    %v443 = vsel %vm93, %v437, 0
    %445 = vmatprep.subr.mxu0 0.0
    %446 = vmatpush1.msra.mxu0 %v84
    %447 = vmatprep.subr.mxu0 0.0
    %448 = vmatpush1.msra.mxu0 %v85
    %449 = vmatprep.subr.mxu0 0.0
    %450 = vmatpush1.msra.mxu0 0.0
    %451 = vmatprep.subr.mxu0 0.0
    %452 = vmatpush1.msra.mxu0 0.0
    %453 = vmatprep.subr.mxu0 0.0
    %454 = vmatpush1.msra.mxu0 0.0
    %455 = vmatprep.subr.mxu0 0.0
    %456 = vmatpush1.msra.mxu0 0.0
    %457 = vmatprep.subr.mxu0 0.0
    %458 = vmatpush1.msra.mxu0 0.0
    %459 = vmatprep.subr.mxu0 0.0
    %460 = vmatpush1.msra.mxu0 0.0
    %461 = vmatprep.subr.mxu0 0.0
    %462 = vmatpush1.msra.mxu0 0.0
    %463 = vmatprep.subr.mxu0 0.0
    %464 = vmatpush1.msra.mxu0 0.0
    %465 = vmatprep.subr.mxu0 0.0
    %466 = vmatpush1.msra.mxu0 0.0
    %467 = vmatprep.subr.mxu0 0.0
    %468 = vmatpush1.msra.mxu0 0.0
    %469 = vmatprep.subr.mxu0 0.0
    %470 = vmatpush1.msra.mxu0 0.0
    %471 = vmatprep.subr.mxu0 0.0
    %472 = vmatpush1.msra.mxu0 0.0
    %473 = vmatprep.subr.mxu0 0.0
    %474 = vmatpush1.msra.mxu0 0.0
    %475 = vmatprep.subr.mxu0 0.0
    %476 = vmatpush1.msra.mxu0 0.0
    %477 = vmatprep.subr.mxu0 0.0
    %478 = vmatpush1.msra.mxu0 0.0
    %479 = vmatprep.subr.mxu0 0.0
    %480 = vmatpush1.msra.mxu0 0.0
    %481 = vmatprep.subr.mxu0 0.0
    %482 = vmatpush1.msra.mxu0 0.0
    %483 = vmatprep.subr.mxu0 0.0
    %484 = vmatpush1.msra.mxu0 0.0
    %485 = vmatprep.subr.mxu0 0.0
    %486 = vmatpush1.msra.mxu0 0.0
    %487 = vmatprep.subr.mxu0 0.0
    %488 = vmatpush1.msra.mxu0 0.0
    %489 = vmatprep.subr.mxu0 0.0
    %490 = vmatpush1.msra.mxu0 0.0
    %491 = vmatprep.subr.mxu0 0.0
    %492 = vmatpush1.msra.mxu0 0.0
    %493 = vmatprep.subr.mxu0 0.0
    %494 = vmatpush1.msra.mxu0 0.0
    %495 = vmatprep.subr.mxu0 0.0
    %496 = vmatpush1.msra.mxu0 0.0
    %497 = vmatprep.subr.mxu0 0.0
    %498 = vmatpush1.msra.mxu0 0.0
    %499 = vmatprep.subr.mxu0 0.0
    %500 = vmatpush1.msra.mxu0 0.0
    %501 = vmatprep.subr.mxu0 0.0
    %502 = vmatpush1.msra.mxu0 0.0
    %503 = vmatprep.subr.mxu0 0.0
    %504 = vmatpush1.msra.mxu0 0.0
    %505 = vmatprep.subr.mxu0 0.0
    %506 = vmatpush1.msra.mxu0 0.0
    %507 = vmatprep.subr.mxu0 0.0
    %508 = vmatpush1.msra.mxu0 0.0
    %509 = vmatprep.mubr.f32.mxu0 0.0
    %510 = vmatmul.mubr.f32.gmra.mrb[0].mxu0 %v443
    %v511 = vpop.f32.mrb[0].mxu0
    %v512 = vadd.f32 0.0, %v511
    %v513 = vpop.f32.mrb[0].mxu0
    %514 = vdwg.mxu0
    %v515 = vadd.f32 %v442, %v512
    %v516 = vxor.u32 %v515, 2147483648
    %v517 = vmul.f32 %v516, 1.442695
    %v518 = vpow.pop %v517
    %v519 = vadd.f32 %v518, 1.0
    %v520 = vrcp.pop %v519
    %v521 = vmul.f32 1.0, %v520
    %v522 = vtanh.pop %v515
    %v523 = vmul.f32 %v521, %v428
    %525 = vrot.lane.b32.xlu0 %v522, 80
    %v526 = vpop.permute.xlu0 %525
    %v528 = vmul.f32 %v521, %v526
    %530 = vrot.lane.b32.xlu0 %v528, 16
    %v531 = vpop.permute.xlu0 %530
    %v533 = vadd.f32 %v523, %v531
    %v534 = vtanh.pop %v533
    %536 = vrot.lane.b32.xlu0 %v534, 16
    %v537 = vpop.permute.xlu0 %536
    %v539 = vmul.f32 %v521, %v537
    %541 = vrot.lane.b32.xlu0 %v539, 96
    %v542 = vpop.permute.xlu0 %541
    %s544 = scalar_lea.vmem [#allocation3], 16
    %545 = vst.msk [vmem:[%s544] sm:$0xff] %vm93, %v542
    %s546 = scalar_lea.vmem [#allocation2], 24
    %v547 = vld [vmem:[%s546] sm:$0xff]
    %v548 = vsel %vm93, %v542, 0
    %550 = vmatprep.subr.mxu0 0.0
    %551 = vmatpush1.msra.mxu0 %v84
    %552 = vmatprep.subr.mxu0 0.0
    %553 = vmatpush1.msra.mxu0 %v85
    %554 = vmatprep.subr.mxu0 0.0
    %555 = vmatpush1.msra.mxu0 0.0
    %556 = vmatprep.subr.mxu0 0.0
    %557 = vmatpush1.msra.mxu0 0.0
    %558 = vmatprep.subr.mxu0 0.0
    %559 = vmatpush1.msra.mxu0 0.0
    %560 = vmatprep.subr.mxu0 0.0
    %561 = vmatpush1.msra.mxu0 0.0
    %562 = vmatprep.subr.mxu0 0.0
    %563 = vmatpush1.msra.mxu0 0.0
    %564 = vmatprep.subr.mxu0 0.0
    %565 = vmatpush1.msra.mxu0 0.0
    %566 = vmatprep.subr.mxu0 0.0
    %567 = vmatpush1.msra.mxu0 0.0
    %568 = vmatprep.subr.mxu0 0.0
    %569 = vmatpush1.msra.mxu0 0.0
    %570 = vmatprep.subr.mxu0 0.0
    %571 = vmatpush1.msra.mxu0 0.0
    %572 = vmatprep.subr.mxu0 0.0
    %573 = vmatpush1.msra.mxu0 0.0
    %574 = vmatprep.subr.mxu0 0.0
    %575 = vmatpush1.msra.mxu0 0.0
    %576 = vmatprep.subr.mxu0 0.0
    %577 = vmatpush1.msra.mxu0 0.0
    %578 = vmatprep.subr.mxu0 0.0
    %579 = vmatpush1.msra.mxu0 0.0
    %580 = vmatprep.subr.mxu0 0.0
    %581 = vmatpush1.msra.mxu0 0.0
    %582 = vmatprep.subr.mxu0 0.0
    %583 = vmatpush1.msra.mxu0 0.0
    %584 = vmatprep.subr.mxu0 0.0
    %585 = vmatpush1.msra.mxu0 0.0
    %586 = vmatprep.subr.mxu0 0.0
    %587 = vmatpush1.msra.mxu0 0.0
    %588 = vmatprep.subr.mxu0 0.0
    %589 = vmatpush1.msra.mxu0 0.0
    %590 = vmatprep.subr.mxu0 0.0
    %591 = vmatpush1.msra.mxu0 0.0
    %592 = vmatprep.subr.mxu0 0.0
    %593 = vmatpush1.msra.mxu0 0.0
    %594 = vmatprep.subr.mxu0 0.0
    %595 = vmatpush1.msra.mxu0 0.0
    %596 = vmatprep.subr.mxu0 0.0
    %597 = vmatpush1.msra.mxu0 0.0
    %598 = vmatprep.subr.mxu0 0.0
    %599 = vmatpush1.msra.mxu0 0.0
    %600 = vmatprep.subr.mxu0 0.0
    %601 = vmatpush1.msra.mxu0 0.0
    %602 = vmatprep.subr.mxu0 0.0
    %603 = vmatpush1.msra.mxu0 0.0
    %604 = vmatprep.subr.mxu0 0.0
    %605 = vmatpush1.msra.mxu0 0.0
    %606 = vmatprep.subr.mxu0 0.0
    %607 = vmatpush1.msra.mxu0 0.0
    %608 = vmatprep.subr.mxu0 0.0
    %609 = vmatpush1.msra.mxu0 0.0
    %610 = vmatprep.subr.mxu0 0.0
    %611 = vmatpush1.msra.mxu0 0.0
    %612 = vmatprep.subr.mxu0 0.0
    %613 = vmatpush1.msra.mxu0 0.0
    %614 = vmatprep.mubr.f32.mxu0 0.0
    %615 = vmatmul.mubr.f32.gmra.mrb[0].mxu0 %v548
    %v616 = vpop.f32.mrb[0].mxu0
    %v617 = vadd.f32 0.0, %v616
    %v618 = vpop.f32.mrb[0].mxu0
    %619 = vdwg.mxu0
    %v620 = vadd.f32 %v547, %v617
    %v621 = vxor.u32 %v620, 2147483648
    %v622 = vmul.f32 %v621, 1.442695
    %v623 = vpow.pop %v622
    %v624 = vadd.f32 %v623, 1.0
    %v625 = vrcp.pop %v624
    %v626 = vmul.f32 1.0, %v625
    %v627 = vtanh.pop %v620
    %v628 = vmul.f32 %v626, %v533
    %630 = vrot.lane.b32.xlu0 %v627, 80
    %v631 = vpop.permute.xlu0 %630
    %v633 = vmul.f32 %v626, %v631
    %635 = vrot.lane.b32.xlu0 %v633, 16
    %v636 = vpop.permute.xlu0 %635
    %v638 = vadd.f32 %v628, %v636
    %v639 = vtanh.pop %v638
    %641 = vrot.lane.b32.xlu0 %v639, 16
    %v642 = vpop.permute.xlu0 %641
    %v644 = vmul.f32 %v626, %v642
    %646 = vrot.lane.b32.xlu0 %v644, 96
    %v647 = vpop.permute.xlu0 %646
    %s649 = scalar_lea.vmem [#allocation3], 24
    %650 = vst.msk [vmem:[%s649] sm:$0xff] %vm93, %v647
    %s651 = scalar_lea.vmem [#allocation2], 32
    %v652 = vld [vmem:[%s651] sm:$0xff]
    %v653 = vsel %vm93, %v647, 0
    %655 = vmatprep.subr.mxu0 0.0
    %656 = vmatpush1.msra.mxu0 %v84
    %657 = vmatprep.subr.mxu0 0.0
    %658 = vmatpush1.msra.mxu0 %v85
    %659 = vmatprep.subr.mxu0 0.0
    %660 = vmatpush1.msra.mxu0 0.0
    %661 = vmatprep.subr.mxu0 0.0
    %662 = vmatpush1.msra.mxu0 0.0
    %663 = vmatprep.subr.mxu0 0.0
    %664 = vmatpush1.msra.mxu0 0.0
    %665 = vmatprep.subr.mxu0 0.0
    %666 = vmatpush1.msra.mxu0 0.0
    %667 = vmatprep.subr.mxu0 0.0
    %668 = vmatpush1.msra.mxu0 0.0
    %669 = vmatprep.subr.mxu0 0.0
    %670 = vmatpush1.msra.mxu0 0.0
    %671 = vmatprep.subr.mxu0 0.0
    %672 = vmatpush1.msra.mxu0 0.0
    %673 = vmatprep.subr.mxu0 0.0
    %674 = vmatpush1.msra.mxu0 0.0
    %675 = vmatprep.subr.mxu0 0.0
    %676 = vmatpush1.msra.mxu0 0.0
    %677 = vmatprep.subr.mxu0 0.0
    %678 = vmatpush1.msra.mxu0 0.0
    %679 = vmatprep.subr.mxu0 0.0
    %680 = vmatpush1.msra.mxu0 0.0
    %681 = vmatprep.subr.mxu0 0.0
    %682 = vmatpush1.msra.mxu0 0.0
    %683 = vmatprep.subr.mxu0 0.0
    %684 = vmatpush1.msra.mxu0 0.0
    %685 = vmatprep.subr.mxu0 0.0
    %686 = vmatpush1.msra.mxu0 0.0
    %687 = vmatprep.subr.mxu0 0.0
    %688 = vmatpush1.msra.mxu0 0.0
    %689 = vmatprep.subr.mxu0 0.0
    %690 = vmatpush1.msra.mxu0 0.0
    %691 = vmatprep.subr.mxu0 0.0
    %692 = vmatpush1.msra.mxu0 0.0
    %693 = vmatprep.subr.mxu0 0.0
    %694 = vmatpush1.msra.mxu0 0.0
    %695 = vmatprep.subr.mxu0 0.0
    %696 = vmatpush1.msra.mxu0 0.0
    %697 = vmatprep.subr.mxu0 0.0
    %698 = vmatpush1.msra.mxu0 0.0
    %699 = vmatprep.subr.mxu0 0.0
    %700 = vmatpush1.msra.mxu0 0.0
    %701 = vmatprep.subr.mxu0 0.0
    %702 = vmatpush1.msra.mxu0 0.0
    %703 = vmatprep.subr.mxu0 0.0
    %704 = vmatpush1.msra.mxu0 0.0
    %705 = vmatprep.subr.mxu0 0.0
    %706 = vmatpush1.msra.mxu0 0.0
    %707 = vmatprep.subr.mxu0 0.0
    %708 = vmatpush1.msra.mxu0 0.0
    %709 = vmatprep.subr.mxu0 0.0
    %710 = vmatpush1.msra.mxu0 0.0
    %711 = vmatprep.subr.mxu0 0.0
    %712 = vmatpush1.msra.mxu0 0.0
    %713 = vmatprep.subr.mxu0 0.0
    %714 = vmatpush1.msra.mxu0 0.0
    %715 = vmatprep.subr.mxu0 0.0
    %716 = vmatpush1.msra.mxu0 0.0
    %717 = vmatprep.subr.mxu0 0.0
    %718 = vmatpush1.msra.mxu0 0.0
    %719 = vmatprep.mubr.f32.mxu0 0.0
    %720 = vmatmul.mubr.f32.gmra.mrb[0].mxu0 %v653
    %v721 = vpop.f32.mrb[0].mxu0
    %v722 = vadd.f32 0.0, %v721
    %v723 = vpop.f32.mrb[0].mxu0
    %724 = vdwg.mxu0
    %v725 = vadd.f32 %v652, %v722
    %v726 = vxor.u32 %v725, 2147483648
    %v727 = vmul.f32 %v726, 1.442695
    %v728 = vpow.pop %v727
    %v729 = vadd.f32 %v728, 1.0
    %v730 = vrcp.pop %v729
    %v731 = vmul.f32 1.0, %v730
    %v732 = vtanh.pop %v725
    %v733 = vmul.f32 %v731, %v638
    %735 = vrot.lane.b32.xlu0 %v732, 80
    %v736 = vpop.permute.xlu0 %735
    %v738 = vmul.f32 %v731, %v736
    %740 = vrot.lane.b32.xlu0 %v738, 16
    %v741 = vpop.permute.xlu0 %740
    %v743 = vadd.f32 %v733, %v741
    %v744 = vtanh.pop %v743
    %746 = vrot.lane.b32.xlu0 %v744, 16
    %v747 = vpop.permute.xlu0 %746
    %v749 = vmul.f32 %v731, %v747
    %751 = vrot.lane.b32.xlu0 %v749, 96
    %v752 = vpop.permute.xlu0 %751
    %s754 = scalar_lea.vmem [#allocation3], 32
    %755 = vst.msk [vmem:[%s754] sm:$0xff] %vm93, %v752
    %s756 = scalar_lea.vmem [#allocation2], 40
    %v757 = vld [vmem:[%s756] sm:$0xff]
    %v758 = vsel %vm93, %v752, 0
    %760 = vmatprep.subr.mxu0 0.0
    %761 = vmatpush1.msra.mxu0 %v84
    %762 = vmatprep.subr.mxu0 0.0
    %763 = vmatpush1.msra.mxu0 %v85
    %764 = vmatprep.subr.mxu0 0.0
    %765 = vmatpush1.msra.mxu0 0.0
    %766 = vmatprep.subr.mxu0 0.0
    %767 = vmatpush1.msra.mxu0 0.0
    %768 = vmatprep.subr.mxu0 0.0
    %769 = vmatpush1.msra.mxu0 0.0
    %770 = vmatprep.subr.mxu0 0.0
    %771 = vmatpush1.msra.mxu0 0.0
    %772 = vmatprep.subr.mxu0 0.0
    %773 = vmatpush1.msra.mxu0 0.0
    %774 = vmatprep.subr.mxu0 0.0
    %775 = vmatpush1.msra.mxu0 0.0
    %776 = vmatprep.subr.mxu0 0.0
    %777 = vmatpush1.msra.mxu0 0.0
    %778 = vmatprep.subr.mxu0 0.0
    %779 = vmatpush1.msra.mxu0 0.0
    %780 = vmatprep.subr.mxu0 0.0
    %781 = vmatpush1.msra.mxu0 0.0
    %782 = vmatprep.subr.mxu0 0.0
    %783 = vmatpush1.msra.mxu0 0.0
    %784 = vmatprep.subr.mxu0 0.0
    %785 = vmatpush1.msra.mxu0 0.0
    %786 = vmatprep.subr.mxu0 0.0
    %787 = vmatpush1.msra.mxu0 0.0
    %788 = vmatprep.subr.mxu0 0.0
    %789 = vmatpush1.msra.mxu0 0.0
    %790 = vmatprep.subr.mxu0 0.0
    %791 = vmatpush1.msra.mxu0 0.0
    %792 = vmatprep.subr.mxu0 0.0
    %793 = vmatpush1.msra.mxu0 0.0
    %794 = vmatprep.subr.mxu0 0.0
    %795 = vmatpush1.msra.mxu0 0.0
    %796 = vmatprep.subr.mxu0 0.0
    %797 = vmatpush1.msra.mxu0 0.0
    %798 = vmatprep.subr.mxu0 0.0
    %799 = vmatpush1.msra.mxu0 0.0
    %800 = vmatprep.subr.mxu0 0.0
    %801 = vmatpush1.msra.mxu0 0.0
    %802 = vmatprep.subr.mxu0 0.0
    %803 = vmatpush1.msra.mxu0 0.0
    %804 = vmatprep.subr.mxu0 0.0
    %805 = vmatpush1.msra.mxu0 0.0
    %806 = vmatprep.subr.mxu0 0.0
    %807 = vmatpush1.msra.mxu0 0.0
    %808 = vmatprep.subr.mxu0 0.0
    %809 = vmatpush1.msra.mxu0 0.0
    %810 = vmatprep.subr.mxu0 0.0
    %811 = vmatpush1.msra.mxu0 0.0
    %812 = vmatprep.subr.mxu0 0.0
    %813 = vmatpush1.msra.mxu0 0.0
    %814 = vmatprep.subr.mxu0 0.0
    %815 = vmatpush1.msra.mxu0 0.0
    %816 = vmatprep.subr.mxu0 0.0
    %817 = vmatpush1.msra.mxu0 0.0
    %818 = vmatprep.subr.mxu0 0.0
    %819 = vmatpush1.msra.mxu0 0.0
    %820 = vmatprep.subr.mxu0 0.0
    %821 = vmatpush1.msra.mxu0 0.0
    %822 = vmatprep.subr.mxu0 0.0
    %823 = vmatpush1.msra.mxu0 0.0
    %824 = vmatprep.mubr.f32.mxu0 0.0
    %825 = vmatmul.mubr.f32.gmra.mrb[0].mxu0 %v758
    %v826 = vpop.f32.mrb[0].mxu0
    %v827 = vadd.f32 0.0, %v826
    %v828 = vpop.f32.mrb[0].mxu0
    %829 = vdwg.mxu0
    %v830 = vadd.f32 %v757, %v827
    %v831 = vxor.u32 %v830, 2147483648
    %v832 = vmul.f32 %v831, 1.442695
    %v833 = vpow.pop %v832
    %v834 = vadd.f32 %v833, 1.0
    %v835 = vrcp.pop %v834
    %v836 = vmul.f32 1.0, %v835
    %v837 = vtanh.pop %v830
    %v838 = vmul.f32 %v836, %v743
    %840 = vrot.lane.b32.xlu0 %v837, 80
    %v841 = vpop.permute.xlu0 %840
    %v843 = vmul.f32 %v836, %v841
    %845 = vrot.lane.b32.xlu0 %v843, 16
    %v846 = vpop.permute.xlu0 %845
    %v848 = vadd.f32 %v838, %v846
    %v849 = vtanh.pop %v848
    %851 = vrot.lane.b32.xlu0 %v849, 16
    %v852 = vpop.permute.xlu0 %851
    %v854 = vmul.f32 %v836, %v852
    %856 = vrot.lane.b32.xlu0 %v854, 96
    %v857 = vpop.permute.xlu0 %856
    %s859 = scalar_lea.vmem [#allocation3], 40
    %860 = vst.msk [vmem:[%s859] sm:$0xff] %vm93, %v857
    %s861 = scalar_lea.vmem [#allocation2], 48
    %v862 = vld [vmem:[%s861] sm:$0xff]
    %v863 = vsel %vm93, %v857, 0
    %865 = vmatprep.subr.mxu0 0.0
    %866 = vmatpush1.msra.mxu0 %v84
    %867 = vmatprep.subr.mxu0 0.0
    %868 = vmatpush1.msra.mxu0 %v85
    %869 = vmatprep.subr.mxu0 0.0
    %870 = vmatpush1.msra.mxu0 0.0
    %871 = vmatprep.subr.mxu0 0.0
    %872 = vmatpush1.msra.mxu0 0.0
    %873 = vmatprep.subr.mxu0 0.0
    %874 = vmatpush1.msra.mxu0 0.0
    %875 = vmatprep.subr.mxu0 0.0
    %876 = vmatpush1.msra.mxu0 0.0
    %877 = vmatprep.subr.mxu0 0.0
    %878 = vmatpush1.msra.mxu0 0.0
    %879 = vmatprep.subr.mxu0 0.0
    %880 = vmatpush1.msra.mxu0 0.0
    %881 = vmatprep.subr.mxu0 0.0
    %882 = vmatpush1.msra.mxu0 0.0
    %883 = vmatprep.subr.mxu0 0.0
    %884 = vmatpush1.msra.mxu0 0.0
    %885 = vmatprep.subr.mxu0 0.0
    %886 = vmatpush1.msra.mxu0 0.0
    %887 = vmatprep.subr.mxu0 0.0
    %888 = vmatpush1.msra.mxu0 0.0
    %889 = vmatprep.subr.mxu0 0.0
    %890 = vmatpush1.msra.mxu0 0.0
    %891 = vmatprep.subr.mxu0 0.0
    %892 = vmatpush1.msra.mxu0 0.0
    %893 = vmatprep.subr.mxu0 0.0
    %894 = vmatpush1.msra.mxu0 0.0
    %895 = vmatprep.subr.mxu0 0.0
    %896 = vmatpush1.msra.mxu0 0.0
    %897 = vmatprep.subr.mxu0 0.0
    %898 = vmatpush1.msra.mxu0 0.0
    %899 = vmatprep.subr.mxu0 0.0
    %900 = vmatpush1.msra.mxu0 0.0
    %901 = vmatprep.subr.mxu0 0.0
    %902 = vmatpush1.msra.mxu0 0.0
    %903 = vmatprep.subr.mxu0 0.0
    %904 = vmatpush1.msra.mxu0 0.0
    %905 = vmatprep.subr.mxu0 0.0
    %906 = vmatpush1.msra.mxu0 0.0
    %907 = vmatprep.subr.mxu0 0.0
    %908 = vmatpush1.msra.mxu0 0.0
    %909 = vmatprep.subr.mxu0 0.0
    %910 = vmatpush1.msra.mxu0 0.0
    %911 = vmatprep.subr.mxu0 0.0
    %912 = vmatpush1.msra.mxu0 0.0
    %913 = vmatprep.subr.mxu0 0.0
    %914 = vmatpush1.msra.mxu0 0.0
    %915 = vmatprep.subr.mxu0 0.0
    %916 = vmatpush1.msra.mxu0 0.0
    %917 = vmatprep.subr.mxu0 0.0
    %918 = vmatpush1.msra.mxu0 0.0
    %919 = vmatprep.subr.mxu0 0.0
    %920 = vmatpush1.msra.mxu0 0.0
    %921 = vmatprep.subr.mxu0 0.0
    %922 = vmatpush1.msra.mxu0 0.0
    %923 = vmatprep.subr.mxu0 0.0
    %924 = vmatpush1.msra.mxu0 0.0
    %925 = vmatprep.subr.mxu0 0.0
    %926 = vmatpush1.msra.mxu0 0.0
    %927 = vmatprep.subr.mxu0 0.0
    %928 = vmatpush1.msra.mxu0 0.0
    %929 = vmatprep.mubr.f32.mxu0 0.0
    %930 = vmatmul.mubr.f32.gmra.mrb[0].mxu0 %v863
    %v931 = vpop.f32.mrb[0].mxu0
    %v932 = vadd.f32 0.0, %v931
    %v933 = vpop.f32.mrb[0].mxu0
    %934 = vdwg.mxu0
    %v935 = vadd.f32 %v862, %v932
    %v936 = vxor.u32 %v935, 2147483648
    %v937 = vmul.f32 %v936, 1.442695
    %v938 = vpow.pop %v937
    %v939 = vadd.f32 %v938, 1.0
    %v940 = vrcp.pop %v939
    %v941 = vmul.f32 1.0, %v940
    %v942 = vtanh.pop %v935
    %v943 = vmul.f32 %v941, %v848
    %945 = vrot.lane.b32.xlu0 %v942, 80
    %v946 = vpop.permute.xlu0 %945
    %v948 = vmul.f32 %v941, %v946
    %950 = vrot.lane.b32.xlu0 %v948, 16
    %v951 = vpop.permute.xlu0 %950
    %v953 = vadd.f32 %v943, %v951
    %v954 = vtanh.pop %v953
    %956 = vrot.lane.b32.xlu0 %v954, 16
    %v957 = vpop.permute.xlu0 %956
    %v959 = vmul.f32 %v941, %v957
    %961 = vrot.lane.b32.xlu0 %v959, 96
    %v962 = vpop.permute.xlu0 %961
    %s964 = scalar_lea.vmem [#allocation3], 48
    %965 = vst.msk [vmem:[%s964] sm:$0xff] %vm93, %v962
    %s966 = scalar_lea.vmem [#allocation2], 56
    %v967 = vld [vmem:[%s966] sm:$0xff]
    %v968 = vsel %vm93, %v962, 0
    %970 = vmatprep.subr.mxu0 0.0
    %971 = vmatpush1.msra.mxu0 %v84
    %972 = vmatprep.subr.mxu0 0.0
    %973 = vmatpush1.msra.mxu0 %v85
    %974 = vmatprep.subr.mxu0 0.0
    %975 = vmatpush1.msra.mxu0 0.0
    %976 = vmatprep.subr.mxu0 0.0
    %977 = vmatpush1.msra.mxu0 0.0
    %978 = vmatprep.subr.mxu0 0.0
    %979 = vmatpush1.msra.mxu0 0.0
    %980 = vmatprep.subr.mxu0 0.0
    %981 = vmatpush1.msra.mxu0 0.0
    %982 = vmatprep.subr.mxu0 0.0
    %983 = vmatpush1.msra.mxu0 0.0
    %984 = vmatprep.subr.mxu0 0.0
    %985 = vmatpush1.msra.mxu0 0.0
    %986 = vmatprep.subr.mxu0 0.0
    %987 = vmatpush1.msra.mxu0 0.0
    %988 = vmatprep.subr.mxu0 0.0
    %989 = vmatpush1.msra.mxu0 0.0
    %990 = vmatprep.subr.mxu0 0.0
    %991 = vmatpush1.msra.mxu0 0.0
    %992 = vmatprep.subr.mxu0 0.0
    %993 = vmatpush1.msra.mxu0 0.0
    %994 = vmatprep.subr.mxu0 0.0
    %995 = vmatpush1.msra.mxu0 0.0
    %996 = vmatprep.subr.mxu0 0.0
    %997 = vmatpush1.msra.mxu0 0.0
    %998 = vmatprep.subr.mxu0 0.0
    %999 = vmatpush1.msra.mxu0 0.0
    %1000 = vmatprep.subr.mxu0 0.0
    %1001 = vmatpush1.msra.mxu0 0.0
    %1002 = vmatprep.subr.mxu0 0.0
    %1003 = vmatpush1.msra.mxu0 0.0
    %1004 = vmatprep.subr.mxu0 0.0
    %1005 = vmatpush1.msra.mxu0 0.0
    %1006 = vmatprep.subr.mxu0 0.0
    %1007 = vmatpush1.msra.mxu0 0.0
    %1008 = vmatprep.subr.mxu0 0.0
    %1009 = vmatpush1.msra.mxu0 0.0
    %1010 = vmatprep.subr.mxu0 0.0
    %1011 = vmatpush1.msra.mxu0 0.0
    %1012 = vmatprep.subr.mxu0 0.0
    %1013 = vmatpush1.msra.mxu0 0.0
    %1014 = vmatprep.subr.mxu0 0.0
    %1015 = vmatpush1.msra.mxu0 0.0
    %1016 = vmatprep.subr.mxu0 0.0
    %1017 = vmatpush1.msra.mxu0 0.0
    %1018 = vmatprep.subr.mxu0 0.0
    %1019 = vmatpush1.msra.mxu0 0.0
    %1020 = vmatprep.subr.mxu0 0.0
    %1021 = vmatpush1.msra.mxu0 0.0
    %1022 = vmatprep.subr.mxu0 0.0
    %1023 = vmatpush1.msra.mxu0 0.0
    %1024 = vmatprep.subr.mxu0 0.0
    %1025 = vmatpush1.msra.mxu0 0.0
    %1026 = vmatprep.subr.mxu0 0.0
    %1027 = vmatpush1.msra.mxu0 0.0
    %1028 = vmatprep.subr.mxu0 0.0
    %1029 = vmatpush1.msra.mxu0 0.0
    %1030 = vmatprep.subr.mxu0 0.0
    %1031 = vmatpush1.msra.mxu0 0.0
    %1032 = vmatprep.subr.mxu0 0.0
    %1033 = vmatpush1.msra.mxu0 0.0
    %1034 = vmatprep.mubr.f32.mxu0 0.0
    %1035 = vmatmul.mubr.f32.gmra.mrb[0].mxu0 %v968
    %v1036 = vpop.f32.mrb[0].mxu0
    %v1037 = vadd.f32 0.0, %v1036
    %v1038 = vpop.f32.mrb[0].mxu0
    %1039 = vdwg.mxu0
    %v1040 = vadd.f32 %v967, %v1037
    %v1041 = vxor.u32 %v1040, 2147483648
    %v1042 = vmul.f32 %v1041, 1.442695
    %v1043 = vpow.pop %v1042
    %v1044 = vadd.f32 %v1043, 1.0
    %v1045 = vrcp.pop %v1044
    %v1046 = vmul.f32 1.0, %v1045
    %v1047 = vtanh.pop %v1040
    %v1048 = vmul.f32 %v1046, %v953
    %1050 = vrot.lane.b32.xlu0 %v1047, 80
    %v1051 = vpop.permute.xlu0 %1050
    %v1053 = vmul.f32 %v1046, %v1051
    %1055 = vrot.lane.b32.xlu0 %v1053, 16
    %v1056 = vpop.permute.xlu0 %1055
    %v1058 = vadd.f32 %v1048, %v1056
    %v1059 = vtanh.pop %v1058
    %1061 = vrot.lane.b32.xlu0 %v1059, 16
    %v1062 = vpop.permute.xlu0 %1061
    %v1064 = vmul.f32 %v1046, %v1062
    %1066 = vrot.lane.b32.xlu0 %v1064, 96
    %v1067 = vpop.permute.xlu0 %1066
    %s1069 = scalar_lea.vmem [#allocation3], 56
    %1070 = vst.msk [vmem:[%s1069] sm:$0xff] %vm93, %v1067
    %s1071 = scalar_lea.vmem [#allocation9], 16
    %v1072 = vld [vmem:[%s1071] sm:$0xff]
    %v1073 = vld [vmem:[%s1071 + $0x8] sm:$0xff]
    %s1074 = scalar_lea.vmem [#allocation10], 16
    %v1075 = vld [vmem:[%s1074] sm:$0xff]
    %v1076 = vld [vmem:[%s1074 + $0x8] sm:$0xff]
    %s1077 = scalar_lea.vmem %s4, 1
    %v1078 = vld [vmem:[%s1077] sm:$0x1]
    %v1079 = vld [vmem:[#allocation3] sm:$0xff]
    %v1080 = vld [vmem:[#allocation3 + $0x8] sm:$0xff]
    %v1081 = vld [vmem:[#allocation3 + $0x10] sm:$0xff]
    %v1082 = vld [vmem:[#allocation3 + $0x18] sm:$0xff]
    %v1083 = vld [vmem:[#allocation3 + $0x20] sm:$0xff]
    %v1084 = vld [vmem:[#allocation3 + $0x28] sm:$0xff]
    %v1085 = vld [vmem:[#allocation3 + $0x30] sm:$0xff]
    %v1086 = vld [vmem:[#allocation3 + $0x38] sm:$0xff]
    %v1088 = vlaneseq
    %v1089 = vshrl.u32 %v1088, 7
    %v1090 = vsub.s32 0, %v1089
    %v1091 = vrot.slane %v1078, %v1090
    %v1094 = vsel %vm93, %v1079, 0
    %v1097 = vsel %vm93, %v1080, 0
    %v1100 = vsel %vm93, %v1081, 0
    %v1103 = vsel %vm93, %v1082, 0
    %v1106 = vsel %vm93, %v1083, 0
    %v1109 = vsel %vm93, %v1084, 0
    %v1112 = vsel %vm93, %v1085, 0
    %v1115 = vsel %vm93, %v1086, 0
    %1117 = vmatprep.subr.mxu0 0.0
    %1118 = vmatpush1.msra.mxu0 %v1072
    %1119 = vmatprep.subr.mxu0 0.0
    %1120 = vmatpush1.msra.mxu0 %v1073
    %1121 = vmatprep.subr.mxu0 0.0
    %1122 = vmatpush1.msra.mxu0 0.0
    %1123 = vmatprep.subr.mxu0 0.0
    %1124 = vmatpush1.msra.mxu0 0.0
    %1125 = vmatprep.subr.mxu0 0.0
    %1126 = vmatpush1.msra.mxu0 0.0
    %1127 = vmatprep.subr.mxu0 0.0
    %1128 = vmatpush1.msra.mxu0 0.0
    %1129 = vmatprep.subr.mxu0 0.0
    %1130 = vmatpush1.msra.mxu0 0.0
    %1131 = vmatprep.subr.mxu0 0.0
    %1132 = vmatpush1.msra.mxu0 0.0
    %1133 = vmatprep.subr.mxu0 0.0
    %1134 = vmatpush1.msra.mxu0 0.0
    %1135 = vmatprep.subr.mxu0 0.0
    %1136 = vmatpush1.msra.mxu0 0.0
    %1137 = vmatprep.subr.mxu0 0.0
    %1138 = vmatpush1.msra.mxu0 0.0
    %1139 = vmatprep.subr.mxu0 0.0
    %1140 = vmatpush1.msra.mxu0 0.0
    %1141 = vmatprep.subr.mxu0 0.0
    %1142 = vmatpush1.msra.mxu0 0.0
    %1143 = vmatprep.subr.mxu0 0.0
    %1144 = vmatpush1.msra.mxu0 0.0
    %1145 = vmatprep.subr.mxu0 0.0
    %1146 = vmatpush1.msra.mxu0 0.0
    %1147 = vmatprep.subr.mxu0 0.0
    %1148 = vmatpush1.msra.mxu0 0.0
    %1149 = vmatprep.subr.mxu0 0.0
    %1150 = vmatpush1.msra.mxu0 0.0
    %1151 = vmatprep.subr.mxu0 0.0
    %1152 = vmatpush1.msra.mxu0 0.0
    %1153 = vmatprep.subr.mxu0 0.0
    %1154 = vmatpush1.msra.mxu0 0.0
    %1155 = vmatprep.subr.mxu0 0.0
    %1156 = vmatpush1.msra.mxu0 0.0
    %1157 = vmatprep.subr.mxu0 0.0
    %1158 = vmatpush1.msra.mxu0 0.0
    %1159 = vmatprep.subr.mxu0 0.0
    %1160 = vmatpush1.msra.mxu0 0.0
    %1161 = vmatprep.subr.mxu0 0.0
    %1162 = vmatpush1.msra.mxu0 0.0
    %1163 = vmatprep.subr.mxu0 0.0
    %1164 = vmatpush1.msra.mxu0 0.0
    %1165 = vmatprep.subr.mxu0 0.0
    %1166 = vmatpush1.msra.mxu0 0.0
    %1167 = vmatprep.subr.mxu0 0.0
    %1168 = vmatpush1.msra.mxu0 0.0
    %1169 = vmatprep.subr.mxu0 0.0
    %1170 = vmatpush1.msra.mxu0 0.0
    %1171 = vmatprep.subr.mxu0 0.0
    %1172 = vmatpush1.msra.mxu0 0.0
    %1173 = vmatprep.subr.mxu0 0.0
    %1174 = vmatpush1.msra.mxu0 0.0
    %1175 = vmatprep.subr.mxu0 0.0
    %1176 = vmatpush1.msra.mxu0 0.0
    %1177 = vmatprep.subr.mxu0 0.0
    %1178 = vmatpush1.msra.mxu0 0.0
    %1179 = vmatprep.subr.mxu0 0.0
    %1180 = vmatpush1.msra.mxu0 0.0
    %1181 = vmatprep.mubr.f32.mxu0 0.0
    %1182 = vmatmul.mubr.f32.gmra.mrb[0].mxu0 %v1094
    %v1183 = vpop.f32.mrb[0].mxu0
    %v1184 = vadd.f32 %v1091, %v1183
    %v1185 = vpop.f32.mrb[0].mxu0
    %1186 = vmatprep.mubr.f32.mxu0 0.0
    %1187 = vmatmul.mubr.f32.gmra.mrb[0].mxu0 %v1097
    %v1188 = vpop.f32.mrb[0].mxu0
    %v1189 = vadd.f32 %v1091, %v1188
    %v1190 = vpop.f32.mrb[0].mxu0
    %1191 = vmatprep.mubr.f32.mxu0 0.0
    %1192 = vmatmul.mubr.f32.gmra.mrb[0].mxu0 %v1100
    %v1193 = vpop.f32.mrb[0].mxu0
    %v1194 = vadd.f32 %v1091, %v1193
    %v1195 = vpop.f32.mrb[0].mxu0
    %1196 = vmatprep.mubr.f32.mxu0 0.0
    %1197 = vmatmul.mubr.f32.gmra.mrb[0].mxu0 %v1103
    %v1198 = vpop.f32.mrb[0].mxu0
    %v1199 = vadd.f32 %v1091, %v1198
    %v1200 = vpop.f32.mrb[0].mxu0
    %1201 = vmatprep.mubr.f32.mxu0 0.0
    %1202 = vmatmul.mubr.f32.gmra.mrb[0].mxu0 %v1106
    %v1203 = vpop.f32.mrb[0].mxu0
    %v1204 = vadd.f32 %v1091, %v1203
    %v1205 = vpop.f32.mrb[0].mxu0
    %1206 = vmatprep.mubr.f32.mxu0 0.0
    %1207 = vmatmul.mubr.f32.gmra.mrb[0].mxu0 %v1109
    %v1208 = vpop.f32.mrb[0].mxu0
    %v1209 = vadd.f32 %v1091, %v1208
    %v1210 = vpop.f32.mrb[0].mxu0
    %1211 = vmatprep.mubr.f32.mxu0 0.0
    %1212 = vmatmul.mubr.f32.gmra.mrb[0].mxu0 %v1112
    %v1213 = vpop.f32.mrb[0].mxu0
    %v1214 = vadd.f32 %v1091, %v1213
    %v1215 = vpop.f32.mrb[0].mxu0
    %1216 = vmatprep.mubr.f32.mxu0 0.0
    %1217 = vmatmul.mubr.f32.gmra.mrb[0].mxu0 %v1115
    %v1218 = vpop.f32.mrb[0].mxu0
    %v1219 = vadd.f32 %v1091, %v1218
    %v1220 = vpop.f32.mrb[0].mxu0
    %1221 = vdwg.mxu0
    %1222 = vst.msk [vmem:[#allocation2] sm:$0xff] %vm223, %v1184
    %1223 = vst.msk [vmem:[#allocation2 + $0x8] sm:$0xff] %vm223, %v1189
    %1224 = vst.msk [vmem:[#allocation2 + $0x10] sm:$0xff] %vm223, %v1194
    %1225 = vst.msk [vmem:[#allocation2 + $0x18] sm:$0xff] %vm223, %v1199
    %1226 = vst.msk [vmem:[#allocation2 + $0x20] sm:$0xff] %vm223, %v1204
    %1227 = vst.msk [vmem:[#allocation2 + $0x28] sm:$0xff] %vm223, %v1209
    %1228 = vst.msk [vmem:[#allocation2 + $0x30] sm:$0xff] %vm223, %v1214
    %1229 = vst.msk [vmem:[#allocation2 + $0x38] sm:$0xff] %vm223, %v1219
    %v1230 = vld [vmem:[#allocation2] sm:$0xff]
    %1231 = vmatprep.subr.mxu0 0.0
    %1232 = vmatpush1.msra.mxu0 %v1075
    %1233 = vmatprep.subr.mxu0 0.0
    %1234 = vmatpush1.msra.mxu0 %v1076
    %1235 = vmatprep.subr.mxu0 0.0
    %1236 = vmatpush1.msra.mxu0 0.0
    %1237 = vmatprep.subr.mxu0 0.0
    %1238 = vmatpush1.msra.mxu0 0.0
    %1239 = vmatprep.subr.mxu0 0.0
    %1240 = vmatpush1.msra.mxu0 0.0
    %1241 = vmatprep.subr.mxu0 0.0
    %1242 = vmatpush1.msra.mxu0 0.0
    %1243 = vmatprep.subr.mxu0 0.0
    %1244 = vmatpush1.msra.mxu0 0.0
    %1245 = vmatprep.subr.mxu0 0.0
    %1246 = vmatpush1.msra.mxu0 0.0
    %1247 = vmatprep.subr.mxu0 0.0
    %1248 = vmatpush1.msra.mxu0 0.0
    %1249 = vmatprep.subr.mxu0 0.0
    %1250 = vmatpush1.msra.mxu0 0.0
    %1251 = vmatprep.subr.mxu0 0.0
    %1252 = vmatpush1.msra.mxu0 0.0
    %1253 = vmatprep.subr.mxu0 0.0
    %1254 = vmatpush1.msra.mxu0 0.0
    %1255 = vmatprep.subr.mxu0 0.0
    %1256 = vmatpush1.msra.mxu0 0.0
    %1257 = vmatprep.subr.mxu0 0.0
    %1258 = vmatpush1.msra.mxu0 0.0
    %1259 = vmatprep.subr.mxu0 0.0
    %1260 = vmatpush1.msra.mxu0 0.0
    %1261 = vmatprep.subr.mxu0 0.0
    %1262 = vmatpush1.msra.mxu0 0.0
    %1263 = vmatprep.subr.mxu0 0.0
    %1264 = vmatpush1.msra.mxu0 0.0
    %1265 = vmatprep.subr.mxu0 0.0
    %1266 = vmatpush1.msra.mxu0 0.0
    %1267 = vmatprep.subr.mxu0 0.0
    %1268 = vmatpush1.msra.mxu0 0.0
    %1269 = vmatprep.subr.mxu0 0.0
    %1270 = vmatpush1.msra.mxu0 0.0
    %1271 = vmatprep.subr.mxu0 0.0
    %1272 = vmatpush1.msra.mxu0 0.0
    %1273 = vmatprep.subr.mxu0 0.0
    %1274 = vmatpush1.msra.mxu0 0.0
    %1275 = vmatprep.subr.mxu0 0.0
    %1276 = vmatpush1.msra.mxu0 0.0
    %1277 = vmatprep.subr.mxu0 0.0
    %1278 = vmatpush1.msra.mxu0 0.0
    %1279 = vmatprep.subr.mxu0 0.0
    %1280 = vmatpush1.msra.mxu0 0.0
    %1281 = vmatprep.subr.mxu0 0.0
    %1282 = vmatpush1.msra.mxu0 0.0
    %1283 = vmatprep.subr.mxu0 0.0
    %1284 = vmatpush1.msra.mxu0 0.0
    %1285 = vmatprep.subr.mxu0 0.0
    %1286 = vmatpush1.msra.mxu0 0.0
    %1287 = vmatprep.subr.mxu0 0.0
    %1288 = vmatpush1.msra.mxu0 0.0
    %1289 = vmatprep.subr.mxu0 0.0
    %1290 = vmatpush1.msra.mxu0 0.0
    %1291 = vmatprep.subr.mxu0 0.0
    %1292 = vmatpush1.msra.mxu0 0.0
    %1293 = vmatprep.subr.mxu0 0.0
    %1294 = vmatpush1.msra.mxu0 0.0
    %1295 = vmatprep.mubr.f32.mxu0 0.0
    %1296 = vmatmul.mubr.f32.gmra.mrb[0].mxu0 %v234
    %v1297 = vpop.f32.mrb[0].mxu0
    %v1298 = vadd.f32 0.0, %v1297
    %v1299 = vpop.f32.mrb[0].mxu0
    %1300 = vdwg.mxu0
    %v1301 = vadd.f32 %v1230, %v1298
    %v1302 = vxor.u32 %v1301, 2147483648
    %v1303 = vmul.f32 %v1302, 1.442695
    %v1304 = vpow.pop %v1303
    %v1305 = vadd.f32 %v1304, 1.0
    %v1306 = vrcp.pop %v1305
    %v1307 = vmul.f32 1.0, %v1306
    %v1308 = vtanh.pop %v1301
    %v1309 = vmul.f32 %v1307, 0.0
    %1311 = vrot.lane.b32.xlu0 %v1308, 80
    %v1312 = vpop.permute.xlu0 %1311
    %v1314 = vmul.f32 %v1307, %v1312
    %1316 = vrot.lane.b32.xlu0 %v1314, 16
    %v1317 = vpop.permute.xlu0 %1316
    %v1319 = vadd.f32 %v1309, %v1317
    %v1320 = vtanh.pop %v1319
    %1322 = vrot.lane.b32.xlu0 %v1320, 16
    %v1323 = vpop.permute.xlu0 %1322
    %v1325 = vmul.f32 %v1307, %v1323
    %v1326 = vld [vmem:[%s336] sm:$0xff]
    %1328 = vrot.lane.b32.xlu0 %v1325, 96
    %v1329 = vpop.permute.xlu0 %1328
    %v1330 = vsel %vm93, %v1329, 0
    %1332 = vmatprep.subr.mxu0 0.0
    %1333 = vmatpush1.msra.mxu0 %v1075
    %1334 = vmatprep.subr.mxu0 0.0
    %1335 = vmatpush1.msra.mxu0 %v1076
    %1336 = vmatprep.subr.mxu0 0.0
    %1337 = vmatpush1.msra.mxu0 0.0
    %1338 = vmatprep.subr.mxu0 0.0
    %1339 = vmatpush1.msra.mxu0 0.0
    %1340 = vmatprep.subr.mxu0 0.0
    %1341 = vmatpush1.msra.mxu0 0.0
    %1342 = vmatprep.subr.mxu0 0.0
    %1343 = vmatpush1.msra.mxu0 0.0
    %1344 = vmatprep.subr.mxu0 0.0
    %1345 = vmatpush1.msra.mxu0 0.0
    %1346 = vmatprep.subr.mxu0 0.0
    %1347 = vmatpush1.msra.mxu0 0.0
    %1348 = vmatprep.subr.mxu0 0.0
    %1349 = vmatpush1.msra.mxu0 0.0
    %1350 = vmatprep.subr.mxu0 0.0
    %1351 = vmatpush1.msra.mxu0 0.0
    %1352 = vmatprep.subr.mxu0 0.0
    %1353 = vmatpush1.msra.mxu0 0.0
    %1354 = vmatprep.subr.mxu0 0.0
    %1355 = vmatpush1.msra.mxu0 0.0
    %1356 = vmatprep.subr.mxu0 0.0
    %1357 = vmatpush1.msra.mxu0 0.0
    %1358 = vmatprep.subr.mxu0 0.0
    %1359 = vmatpush1.msra.mxu0 0.0
    %1360 = vmatprep.subr.mxu0 0.0
    %1361 = vmatpush1.msra.mxu0 0.0
    %1362 = vmatprep.subr.mxu0 0.0
    %1363 = vmatpush1.msra.mxu0 0.0
    %1364 = vmatprep.subr.mxu0 0.0
    %1365 = vmatpush1.msra.mxu0 0.0
    %1366 = vmatprep.subr.mxu0 0.0
    %1367 = vmatpush1.msra.mxu0 0.0
    %1368 = vmatprep.subr.mxu0 0.0
    %1369 = vmatpush1.msra.mxu0 0.0
    %1370 = vmatprep.subr.mxu0 0.0
    %1371 = vmatpush1.msra.mxu0 0.0
    %1372 = vmatprep.subr.mxu0 0.0
    %1373 = vmatpush1.msra.mxu0 0.0
    %1374 = vmatprep.subr.mxu0 0.0
    %1375 = vmatpush1.msra.mxu0 0.0
    %1376 = vmatprep.subr.mxu0 0.0
    %1377 = vmatpush1.msra.mxu0 0.0
    %1378 = vmatprep.subr.mxu0 0.0
    %1379 = vmatpush1.msra.mxu0 0.0
    %1380 = vmatprep.subr.mxu0 0.0
    %1381 = vmatpush1.msra.mxu0 0.0
    %1382 = vmatprep.subr.mxu0 0.0
    %1383 = vmatpush1.msra.mxu0 0.0
    %1384 = vmatprep.subr.mxu0 0.0
    %1385 = vmatpush1.msra.mxu0 0.0
    %1386 = vmatprep.subr.mxu0 0.0
    %1387 = vmatpush1.msra.mxu0 0.0
    %1388 = vmatprep.subr.mxu0 0.0
    %1389 = vmatpush1.msra.mxu0 0.0
    %1390 = vmatprep.subr.mxu0 0.0
    %1391 = vmatpush1.msra.mxu0 0.0
    %1392 = vmatprep.subr.mxu0 0.0
    %1393 = vmatpush1.msra.mxu0 0.0
    %1394 = vmatprep.subr.mxu0 0.0
    %1395 = vmatpush1.msra.mxu0 0.0
    %1396 = vmatprep.mubr.f32.mxu0 0.0
    %1397 = vmatmul.mubr.f32.gmra.mrb[0].mxu0 %v1330
    %v1398 = vpop.f32.mrb[0].mxu0
    %v1399 = vadd.f32 0.0, %v1398
    %v1400 = vpop.f32.mrb[0].mxu0
    %1401 = vdwg.mxu0
    %v1402 = vadd.f32 %v1326, %v1399
    %v1403 = vxor.u32 %v1402, 2147483648
    %v1404 = vmul.f32 %v1403, 1.442695
    %v1405 = vpow.pop %v1404
    %v1406 = vadd.f32 %v1405, 1.0
    %v1407 = vrcp.pop %v1406
    %v1408 = vmul.f32 1.0, %v1407
    %v1409 = vtanh.pop %v1402
    %v1410 = vmul.f32 %v1408, %v1319
    %1412 = vrot.lane.b32.xlu0 %v1409, 80
    %v1413 = vpop.permute.xlu0 %1412
    %v1415 = vmul.f32 %v1408, %v1413
    %1417 = vrot.lane.b32.xlu0 %v1415, 16
    %v1418 = vpop.permute.xlu0 %1417
    %v1420 = vadd.f32 %v1410, %v1418
    %v1421 = vtanh.pop %v1420
    %1423 = vrot.lane.b32.xlu0 %v1421, 16
    %v1424 = vpop.permute.xlu0 %1423
    %v1426 = vmul.f32 %v1408, %v1424
    %v1427 = vld [vmem:[%s441] sm:$0xff]
    %1429 = vrot.lane.b32.xlu0 %v1426, 96
    %v1430 = vpop.permute.xlu0 %1429
    %v1431 = vsel %vm93, %v1430, 0
    %1433 = vmatprep.subr.mxu0 0.0
    %1434 = vmatpush1.msra.mxu0 %v1075
    %1435 = vmatprep.subr.mxu0 0.0
    %1436 = vmatpush1.msra.mxu0 %v1076
    %1437 = vmatprep.subr.mxu0 0.0
    %1438 = vmatpush1.msra.mxu0 0.0
    %1439 = vmatprep.subr.mxu0 0.0
    %1440 = vmatpush1.msra.mxu0 0.0
    %1441 = vmatprep.subr.mxu0 0.0
    %1442 = vmatpush1.msra.mxu0 0.0
    %1443 = vmatprep.subr.mxu0 0.0
    %1444 = vmatpush1.msra.mxu0 0.0
    %1445 = vmatprep.subr.mxu0 0.0
    %1446 = vmatpush1.msra.mxu0 0.0
    %1447 = vmatprep.subr.mxu0 0.0
    %1448 = vmatpush1.msra.mxu0 0.0
    %1449 = vmatprep.subr.mxu0 0.0
    %1450 = vmatpush1.msra.mxu0 0.0
    %1451 = vmatprep.subr.mxu0 0.0
    %1452 = vmatpush1.msra.mxu0 0.0
    %1453 = vmatprep.subr.mxu0 0.0
    %1454 = vmatpush1.msra.mxu0 0.0
    %1455 = vmatprep.subr.mxu0 0.0
    %1456 = vmatpush1.msra.mxu0 0.0
    %1457 = vmatprep.subr.mxu0 0.0
    %1458 = vmatpush1.msra.mxu0 0.0
    %1459 = vmatprep.subr.mxu0 0.0
    %1460 = vmatpush1.msra.mxu0 0.0
    %1461 = vmatprep.subr.mxu0 0.0
    %1462 = vmatpush1.msra.mxu0 0.0
    %1463 = vmatprep.subr.mxu0 0.0
    %1464 = vmatpush1.msra.mxu0 0.0
    %1465 = vmatprep.subr.mxu0 0.0
    %1466 = vmatpush1.msra.mxu0 0.0
    %1467 = vmatprep.subr.mxu0 0.0
    %1468 = vmatpush1.msra.mxu0 0.0
    %1469 = vmatprep.subr.mxu0 0.0
    %1470 = vmatpush1.msra.mxu0 0.0
    %1471 = vmatprep.subr.mxu0 0.0
    %1472 = vmatpush1.msra.mxu0 0.0
    %1473 = vmatprep.subr.mxu0 0.0
    %1474 = vmatpush1.msra.mxu0 0.0
    %1475 = vmatprep.subr.mxu0 0.0
    %1476 = vmatpush1.msra.mxu0 0.0
    %1477 = vmatprep.subr.mxu0 0.0
    %1478 = vmatpush1.msra.mxu0 0.0
    %1479 = vmatprep.subr.mxu0 0.0
    %1480 = vmatpush1.msra.mxu0 0.0
    %1481 = vmatprep.subr.mxu0 0.0
    %1482 = vmatpush1.msra.mxu0 0.0
    %1483 = vmatprep.subr.mxu0 0.0
    %1484 = vmatpush1.msra.mxu0 0.0
    %1485 = vmatprep.subr.mxu0 0.0
    %1486 = vmatpush1.msra.mxu0 0.0
    %1487 = vmatprep.subr.mxu0 0.0
    %1488 = vmatpush1.msra.mxu0 0.0
    %1489 = vmatprep.subr.mxu0 0.0
    %1490 = vmatpush1.msra.mxu0 0.0
    %1491 = vmatprep.subr.mxu0 0.0
    %1492 = vmatpush1.msra.mxu0 0.0
    %1493 = vmatprep.subr.mxu0 0.0
    %1494 = vmatpush1.msra.mxu0 0.0
    %1495 = vmatprep.subr.mxu0 0.0
    %1496 = vmatpush1.msra.mxu0 0.0
    %1497 = vmatprep.mubr.f32.mxu0 0.0
    %1498 = vmatmul.mubr.f32.gmra.mrb[0].mxu0 %v1431
    %v1499 = vpop.f32.mrb[0].mxu0
    %v1500 = vadd.f32 0.0, %v1499
    %v1501 = vpop.f32.mrb[0].mxu0
    %1502 = vdwg.mxu0
    %v1503 = vadd.f32 %v1427, %v1500
    %v1504 = vxor.u32 %v1503, 2147483648
    %v1505 = vmul.f32 %v1504, 1.442695
    %v1506 = vpow.pop %v1505
    %v1507 = vadd.f32 %v1506, 1.0
    %v1508 = vrcp.pop %v1507
    %v1509 = vmul.f32 1.0, %v1508
    %v1510 = vtanh.pop %v1503
    %v1511 = vmul.f32 %v1509, %v1420
    %1513 = vrot.lane.b32.xlu0 %v1510, 80
    %v1514 = vpop.permute.xlu0 %1513
    %v1516 = vmul.f32 %v1509, %v1514
    %1518 = vrot.lane.b32.xlu0 %v1516, 16
    %v1519 = vpop.permute.xlu0 %1518
    %v1521 = vadd.f32 %v1511, %v1519
    %v1522 = vtanh.pop %v1521
    %1524 = vrot.lane.b32.xlu0 %v1522, 16
    %v1525 = vpop.permute.xlu0 %1524
    %v1527 = vmul.f32 %v1509, %v1525
    %v1528 = vld [vmem:[%s546] sm:$0xff]
    %1530 = vrot.lane.b32.xlu0 %v1527, 96
    %v1531 = vpop.permute.xlu0 %1530
    %v1532 = vsel %vm93, %v1531, 0
    %1534 = vmatprep.subr.mxu0 0.0
    %1535 = vmatpush1.msra.mxu0 %v1075
    %1536 = vmatprep.subr.mxu0 0.0
    %1537 = vmatpush1.msra.mxu0 %v1076
    %1538 = vmatprep.subr.mxu0 0.0
    %1539 = vmatpush1.msra.mxu0 0.0
    %1540 = vmatprep.subr.mxu0 0.0
    %1541 = vmatpush1.msra.mxu0 0.0
    %1542 = vmatprep.subr.mxu0 0.0
    %1543 = vmatpush1.msra.mxu0 0.0
    %1544 = vmatprep.subr.mxu0 0.0
    %1545 = vmatpush1.msra.mxu0 0.0
    %1546 = vmatprep.subr.mxu0 0.0
    %1547 = vmatpush1.msra.mxu0 0.0
    %1548 = vmatprep.subr.mxu0 0.0
    %1549 = vmatpush1.msra.mxu0 0.0
    %1550 = vmatprep.subr.mxu0 0.0
    %1551 = vmatpush1.msra.mxu0 0.0
    %1552 = vmatprep.subr.mxu0 0.0
    %1553 = vmatpush1.msra.mxu0 0.0
    %1554 = vmatprep.subr.mxu0 0.0
    %1555 = vmatpush1.msra.mxu0 0.0
    %1556 = vmatprep.subr.mxu0 0.0
    %1557 = vmatpush1.msra.mxu0 0.0
    %1558 = vmatprep.subr.mxu0 0.0
    %1559 = vmatpush1.msra.mxu0 0.0
    %1560 = vmatprep.subr.mxu0 0.0
    %1561 = vmatpush1.msra.mxu0 0.0
    %1562 = vmatprep.subr.mxu0 0.0
    %1563 = vmatpush1.msra.mxu0 0.0
    %1564 = vmatprep.subr.mxu0 0.0
    %1565 = vmatpush1.msra.mxu0 0.0
    %1566 = vmatprep.subr.mxu0 0.0
    %1567 = vmatpush1.msra.mxu0 0.0
    %1568 = vmatprep.subr.mxu0 0.0
    %1569 = vmatpush1.msra.mxu0 0.0
    %1570 = vmatprep.subr.mxu0 0.0
    %1571 = vmatpush1.msra.mxu0 0.0
    %1572 = vmatprep.subr.mxu0 0.0
    %1573 = vmatpush1.msra.mxu0 0.0
    %1574 = vmatprep.subr.mxu0 0.0
    %1575 = vmatpush1.msra.mxu0 0.0
    %1576 = vmatprep.subr.mxu0 0.0
    %1577 = vmatpush1.msra.mxu0 0.0
    %1578 = vmatprep.subr.mxu0 0.0
    %1579 = vmatpush1.msra.mxu0 0.0
    %1580 = vmatprep.subr.mxu0 0.0
    %1581 = vmatpush1.msra.mxu0 0.0
    %1582 = vmatprep.subr.mxu0 0.0
    %1583 = vmatpush1.msra.mxu0 0.0
    %1584 = vmatprep.subr.mxu0 0.0
    %1585 = vmatpush1.msra.mxu0 0.0
    %1586 = vmatprep.subr.mxu0 0.0
    %1587 = vmatpush1.msra.mxu0 0.0
    %1588 = vmatprep.subr.mxu0 0.0
    %1589 = vmatpush1.msra.mxu0 0.0
    %1590 = vmatprep.subr.mxu0 0.0
    %1591 = vmatpush1.msra.mxu0 0.0
    %1592 = vmatprep.subr.mxu0 0.0
    %1593 = vmatpush1.msra.mxu0 0.0
    %1594 = vmatprep.subr.mxu0 0.0
    %1595 = vmatpush1.msra.mxu0 0.0
    %1596 = vmatprep.subr.mxu0 0.0
    %1597 = vmatpush1.msra.mxu0 0.0
    %1598 = vmatprep.mubr.f32.mxu0 0.0
    %1599 = vmatmul.mubr.f32.gmra.mrb[0].mxu0 %v1532
    %v1600 = vpop.f32.mrb[0].mxu0
    %v1601 = vadd.f32 0.0, %v1600
    %v1602 = vpop.f32.mrb[0].mxu0
    %1603 = vdwg.mxu0
    %v1604 = vadd.f32 %v1528, %v1601
    %v1605 = vxor.u32 %v1604, 2147483648
    %v1606 = vmul.f32 %v1605, 1.442695
    %v1607 = vpow.pop %v1606
    %v1608 = vadd.f32 %v1607, 1.0
    %v1609 = vrcp.pop %v1608
    %v1610 = vmul.f32 1.0, %v1609
    %v1611 = vtanh.pop %v1604
    %v1612 = vmul.f32 %v1610, %v1521
    %1614 = vrot.lane.b32.xlu0 %v1611, 80
    %v1615 = vpop.permute.xlu0 %1614
    %v1617 = vmul.f32 %v1610, %v1615
    %1619 = vrot.lane.b32.xlu0 %v1617, 16
    %v1620 = vpop.permute.xlu0 %1619
    %v1622 = vadd.f32 %v1612, %v1620
    %v1623 = vtanh.pop %v1622
    %1625 = vrot.lane.b32.xlu0 %v1623, 16
    %v1626 = vpop.permute.xlu0 %1625
    %v1628 = vmul.f32 %v1610, %v1626
    %v1629 = vld [vmem:[%s651] sm:$0xff]
    %1631 = vrot.lane.b32.xlu0 %v1628, 96
    %v1632 = vpop.permute.xlu0 %1631
    %v1633 = vsel %vm93, %v1632, 0
    %1635 = vmatprep.subr.mxu0 0.0
    %1636 = vmatpush1.msra.mxu0 %v1075
    %1637 = vmatprep.subr.mxu0 0.0
    %1638 = vmatpush1.msra.mxu0 %v1076
    %1639 = vmatprep.subr.mxu0 0.0
    %1640 = vmatpush1.msra.mxu0 0.0
    %1641 = vmatprep.subr.mxu0 0.0
    %1642 = vmatpush1.msra.mxu0 0.0
    %1643 = vmatprep.subr.mxu0 0.0
    %1644 = vmatpush1.msra.mxu0 0.0
    %1645 = vmatprep.subr.mxu0 0.0
    %1646 = vmatpush1.msra.mxu0 0.0
    %1647 = vmatprep.subr.mxu0 0.0
    %1648 = vmatpush1.msra.mxu0 0.0
    %1649 = vmatprep.subr.mxu0 0.0
    %1650 = vmatpush1.msra.mxu0 0.0
    %1651 = vmatprep.subr.mxu0 0.0
    %1652 = vmatpush1.msra.mxu0 0.0
    %1653 = vmatprep.subr.mxu0 0.0
    %1654 = vmatpush1.msra.mxu0 0.0
    %1655 = vmatprep.subr.mxu0 0.0
    %1656 = vmatpush1.msra.mxu0 0.0
    %1657 = vmatprep.subr.mxu0 0.0
    %1658 = vmatpush1.msra.mxu0 0.0
    %1659 = vmatprep.subr.mxu0 0.0
    %1660 = vmatpush1.msra.mxu0 0.0
    %1661 = vmatprep.subr.mxu0 0.0
    %1662 = vmatpush1.msra.mxu0 0.0
    %1663 = vmatprep.subr.mxu0 0.0
    %1664 = vmatpush1.msra.mxu0 0.0
    %1665 = vmatprep.subr.mxu0 0.0
    %1666 = vmatpush1.msra.mxu0 0.0
    %1667 = vmatprep.subr.mxu0 0.0
    %1668 = vmatpush1.msra.mxu0 0.0
    %1669 = vmatprep.subr.mxu0 0.0
    %1670 = vmatpush1.msra.mxu0 0.0
    %1671 = vmatprep.subr.mxu0 0.0
    %1672 = vmatpush1.msra.mxu0 0.0
    %1673 = vmatprep.subr.mxu0 0.0
    %1674 = vmatpush1.msra.mxu0 0.0
    %1675 = vmatprep.subr.mxu0 0.0
    %1676 = vmatpush1.msra.mxu0 0.0
    %1677 = vmatprep.subr.mxu0 0.0
    %1678 = vmatpush1.msra.mxu0 0.0
    %1679 = vmatprep.subr.mxu0 0.0
    %1680 = vmatpush1.msra.mxu0 0.0
    %1681 = vmatprep.subr.mxu0 0.0
    %1682 = vmatpush1.msra.mxu0 0.0
    %1683 = vmatprep.subr.mxu0 0.0
    %1684 = vmatpush1.msra.mxu0 0.0
    %1685 = vmatprep.subr.mxu0 0.0
    %1686 = vmatpush1.msra.mxu0 0.0
    %1687 = vmatprep.subr.mxu0 0.0
    %1688 = vmatpush1.msra.mxu0 0.0
    %1689 = vmatprep.subr.mxu0 0.0
    %1690 = vmatpush1.msra.mxu0 0.0
    %1691 = vmatprep.subr.mxu0 0.0
    %1692 = vmatpush1.msra.mxu0 0.0
    %1693 = vmatprep.subr.mxu0 0.0
    %1694 = vmatpush1.msra.mxu0 0.0
    %1695 = vmatprep.subr.mxu0 0.0
    %1696 = vmatpush1.msra.mxu0 0.0
    %1697 = vmatprep.subr.mxu0 0.0
    %1698 = vmatpush1.msra.mxu0 0.0
    %1699 = vmatprep.mubr.f32.mxu0 0.0
    %1700 = vmatmul.mubr.f32.gmra.mrb[0].mxu0 %v1633
    %v1701 = vpop.f32.mrb[0].mxu0
    %v1702 = vadd.f32 0.0, %v1701
    %v1703 = vpop.f32.mrb[0].mxu0
    %1704 = vdwg.mxu0
    %v1705 = vadd.f32 %v1629, %v1702
    %v1706 = vxor.u32 %v1705, 2147483648
    %v1707 = vmul.f32 %v1706, 1.442695
    %v1708 = vpow.pop %v1707
    %v1709 = vadd.f32 %v1708, 1.0
    %v1710 = vrcp.pop %v1709
    %v1711 = vmul.f32 1.0, %v1710
    %v1712 = vtanh.pop %v1705
    %v1713 = vmul.f32 %v1711, %v1622
    %1715 = vrot.lane.b32.xlu0 %v1712, 80
    %v1716 = vpop.permute.xlu0 %1715
    %v1718 = vmul.f32 %v1711, %v1716
    %1720 = vrot.lane.b32.xlu0 %v1718, 16
    %v1721 = vpop.permute.xlu0 %1720
    %v1723 = vadd.f32 %v1713, %v1721
    %v1724 = vtanh.pop %v1723
    %1726 = vrot.lane.b32.xlu0 %v1724, 16
    %v1727 = vpop.permute.xlu0 %1726
    %v1729 = vmul.f32 %v1711, %v1727
    %v1730 = vld [vmem:[%s756] sm:$0xff]
    %1732 = vrot.lane.b32.xlu0 %v1729, 96
    %v1733 = vpop.permute.xlu0 %1732
    %v1734 = vsel %vm93, %v1733, 0
    %1736 = vmatprep.subr.mxu0 0.0
    %1737 = vmatpush1.msra.mxu0 %v1075
    %1738 = vmatprep.subr.mxu0 0.0
    %1739 = vmatpush1.msra.mxu0 %v1076
    %1740 = vmatprep.subr.mxu0 0.0
    %1741 = vmatpush1.msra.mxu0 0.0
    %1742 = vmatprep.subr.mxu0 0.0
    %1743 = vmatpush1.msra.mxu0 0.0
    %1744 = vmatprep.subr.mxu0 0.0
    %1745 = vmatpush1.msra.mxu0 0.0
    %1746 = vmatprep.subr.mxu0 0.0
    %1747 = vmatpush1.msra.mxu0 0.0
    %1748 = vmatprep.subr.mxu0 0.0
    %1749 = vmatpush1.msra.mxu0 0.0
    %1750 = vmatprep.subr.mxu0 0.0
    %1751 = vmatpush1.msra.mxu0 0.0
    %1752 = vmatprep.subr.mxu0 0.0
    %1753 = vmatpush1.msra.mxu0 0.0
    %1754 = vmatprep.subr.mxu0 0.0
    %1755 = vmatpush1.msra.mxu0 0.0
    %1756 = vmatprep.subr.mxu0 0.0
    %1757 = vmatpush1.msra.mxu0 0.0
    %1758 = vmatprep.subr.mxu0 0.0
    %1759 = vmatpush1.msra.mxu0 0.0
    %1760 = vmatprep.subr.mxu0 0.0
    %1761 = vmatpush1.msra.mxu0 0.0
    %1762 = vmatprep.subr.mxu0 0.0
    %1763 = vmatpush1.msra.mxu0 0.0
    %1764 = vmatprep.subr.mxu0 0.0
    %1765 = vmatpush1.msra.mxu0 0.0
    %1766 = vmatprep.subr.mxu0 0.0
    %1767 = vmatpush1.msra.mxu0 0.0
    %1768 = vmatprep.subr.mxu0 0.0
    %1769 = vmatpush1.msra.mxu0 0.0
    %1770 = vmatprep.subr.mxu0 0.0
    %1771 = vmatpush1.msra.mxu0 0.0
    %1772 = vmatprep.subr.mxu0 0.0
    %1773 = vmatpush1.msra.mxu0 0.0
    %1774 = vmatprep.subr.mxu0 0.0
    %1775 = vmatpush1.msra.mxu0 0.0
    %1776 = vmatprep.subr.mxu0 0.0
    %1777 = vmatpush1.msra.mxu0 0.0
    %1778 = vmatprep.subr.mxu0 0.0
    %1779 = vmatpush1.msra.mxu0 0.0
    %1780 = vmatprep.subr.mxu0 0.0
    %1781 = vmatpush1.msra.mxu0 0.0
    %1782 = vmatprep.subr.mxu0 0.0
    %1783 = vmatpush1.msra.mxu0 0.0
    %1784 = vmatprep.subr.mxu0 0.0
    %1785 = vmatpush1.msra.mxu0 0.0
    %1786 = vmatprep.subr.mxu0 0.0
    %1787 = vmatpush1.msra.mxu0 0.0
    %1788 = vmatprep.subr.mxu0 0.0
    %1789 = vmatpush1.msra.mxu0 0.0
    %1790 = vmatprep.subr.mxu0 0.0
    %1791 = vmatpush1.msra.mxu0 0.0
    %1792 = vmatprep.subr.mxu0 0.0
    %1793 = vmatpush1.msra.mxu0 0.0
    %1794 = vmatprep.subr.mxu0 0.0
    %1795 = vmatpush1.msra.mxu0 0.0
    %1796 = vmatprep.subr.mxu0 0.0
    %1797 = vmatpush1.msra.mxu0 0.0
    %1798 = vmatprep.subr.mxu0 0.0
    %1799 = vmatpush1.msra.mxu0 0.0
    %1800 = vmatprep.mubr.f32.mxu0 0.0
    %1801 = vmatmul.mubr.f32.gmra.mrb[0].mxu0 %v1734
    %v1802 = vpop.f32.mrb[0].mxu0
    %v1803 = vadd.f32 0.0, %v1802
    %v1804 = vpop.f32.mrb[0].mxu0
    %1805 = vdwg.mxu0
    %v1806 = vadd.f32 %v1730, %v1803
    %v1807 = vxor.u32 %v1806, 2147483648
    %v1808 = vmul.f32 %v1807, 1.442695
    %v1809 = vpow.pop %v1808
    %v1810 = vadd.f32 %v1809, 1.0
    %v1811 = vrcp.pop %v1810
    %v1812 = vmul.f32 1.0, %v1811
    %v1813 = vtanh.pop %v1806
    %v1814 = vmul.f32 %v1812, %v1723
    %1816 = vrot.lane.b32.xlu0 %v1813, 80
    %v1817 = vpop.permute.xlu0 %1816
    %v1819 = vmul.f32 %v1812, %v1817
    %1821 = vrot.lane.b32.xlu0 %v1819, 16
    %v1822 = vpop.permute.xlu0 %1821
    %v1824 = vadd.f32 %v1814, %v1822
    %v1825 = vtanh.pop %v1824
    %1827 = vrot.lane.b32.xlu0 %v1825, 16
    %v1828 = vpop.permute.xlu0 %1827
    %v1830 = vmul.f32 %v1812, %v1828
    %v1831 = vld [vmem:[%s861] sm:$0xff]
    %1833 = vrot.lane.b32.xlu0 %v1830, 96
    %v1834 = vpop.permute.xlu0 %1833
    %v1835 = vsel %vm93, %v1834, 0
    %1837 = vmatprep.subr.mxu0 0.0
    %1838 = vmatpush1.msra.mxu0 %v1075
    %1839 = vmatprep.subr.mxu0 0.0
    %1840 = vmatpush1.msra.mxu0 %v1076
    %1841 = vmatprep.subr.mxu0 0.0
    %1842 = vmatpush1.msra.mxu0 0.0
    %1843 = vmatprep.subr.mxu0 0.0
    %1844 = vmatpush1.msra.mxu0 0.0
    %1845 = vmatprep.subr.mxu0 0.0
    %1846 = vmatpush1.msra.mxu0 0.0
    %1847 = vmatprep.subr.mxu0 0.0
    %1848 = vmatpush1.msra.mxu0 0.0
    %1849 = vmatprep.subr.mxu0 0.0
    %1850 = vmatpush1.msra.mxu0 0.0
    %1851 = vmatprep.subr.mxu0 0.0
    %1852 = vmatpush1.msra.mxu0 0.0
    %1853 = vmatprep.subr.mxu0 0.0
    %1854 = vmatpush1.msra.mxu0 0.0
    %1855 = vmatprep.subr.mxu0 0.0
    %1856 = vmatpush1.msra.mxu0 0.0
    %1857 = vmatprep.subr.mxu0 0.0
    %1858 = vmatpush1.msra.mxu0 0.0
    %1859 = vmatprep.subr.mxu0 0.0
    %1860 = vmatpush1.msra.mxu0 0.0
    %1861 = vmatprep.subr.mxu0 0.0
    %1862 = vmatpush1.msra.mxu0 0.0
    %1863 = vmatprep.subr.mxu0 0.0
    %1864 = vmatpush1.msra.mxu0 0.0
    %1865 = vmatprep.subr.mxu0 0.0
    %1866 = vmatpush1.msra.mxu0 0.0
    %1867 = vmatprep.subr.mxu0 0.0
    %1868 = vmatpush1.msra.mxu0 0.0
    %1869 = vmatprep.subr.mxu0 0.0
    %1870 = vmatpush1.msra.mxu0 0.0
    %1871 = vmatprep.subr.mxu0 0.0
    %1872 = vmatpush1.msra.mxu0 0.0
    %1873 = vmatprep.subr.mxu0 0.0
    %1874 = vmatpush1.msra.mxu0 0.0
    %1875 = vmatprep.subr.mxu0 0.0
    %1876 = vmatpush1.msra.mxu0 0.0
    %1877 = vmatprep.subr.mxu0 0.0
    %1878 = vmatpush1.msra.mxu0 0.0
    %1879 = vmatprep.subr.mxu0 0.0
    %1880 = vmatpush1.msra.mxu0 0.0
    %1881 = vmatprep.subr.mxu0 0.0
    %1882 = vmatpush1.msra.mxu0 0.0
    %1883 = vmatprep.subr.mxu0 0.0
    %1884 = vmatpush1.msra.mxu0 0.0
    %1885 = vmatprep.subr.mxu0 0.0
    %1886 = vmatpush1.msra.mxu0 0.0
    %1887 = vmatprep.subr.mxu0 0.0
    %1888 = vmatpush1.msra.mxu0 0.0
    %1889 = vmatprep.subr.mxu0 0.0
    %1890 = vmatpush1.msra.mxu0 0.0
    %1891 = vmatprep.subr.mxu0 0.0
    %1892 = vmatpush1.msra.mxu0 0.0
    %1893 = vmatprep.subr.mxu0 0.0
    %1894 = vmatpush1.msra.mxu0 0.0
    %1895 = vmatprep.subr.mxu0 0.0
    %1896 = vmatpush1.msra.mxu0 0.0
    %1897 = vmatprep.subr.mxu0 0.0
    %1898 = vmatpush1.msra.mxu0 0.0
    %1899 = vmatprep.subr.mxu0 0.0
    %1900 = vmatpush1.msra.mxu0 0.0
    %1901 = vmatprep.mubr.f32.mxu0 0.0
    %1902 = vmatmul.mubr.f32.gmra.mrb[0].mxu0 %v1835
    %v1903 = vpop.f32.mrb[0].mxu0
    %v1904 = vadd.f32 0.0, %v1903
    %v1905 = vpop.f32.mrb[0].mxu0
    %1906 = vdwg.mxu0
    %v1907 = vadd.f32 %v1831, %v1904
    %v1908 = vxor.u32 %v1907, 2147483648
    %v1909 = vmul.f32 %v1908, 1.442695
    %v1910 = vpow.pop %v1909
    %v1911 = vadd.f32 %v1910, 1.0
    %v1912 = vrcp.pop %v1911
    %v1913 = vmul.f32 1.0, %v1912
    %v1914 = vtanh.pop %v1907
    %v1915 = vmul.f32 %v1913, %v1824
    %1917 = vrot.lane.b32.xlu0 %v1914, 80
    %v1918 = vpop.permute.xlu0 %1917
    %v1920 = vmul.f32 %v1913, %v1918
    %1922 = vrot.lane.b32.xlu0 %v1920, 16
    %v1923 = vpop.permute.xlu0 %1922
    %v1925 = vadd.f32 %v1915, %v1923
    %v1926 = vtanh.pop %v1925
    %1928 = vrot.lane.b32.xlu0 %v1926, 16
    %v1929 = vpop.permute.xlu0 %1928
    %v1931 = vmul.f32 %v1913, %v1929
    %v1932 = vld [vmem:[%s966] sm:$0xff]
    %1934 = vrot.lane.b32.xlu0 %v1931, 96
    %v1935 = vpop.permute.xlu0 %1934
    %v1936 = vsel %vm93, %v1935, 0
    %1938 = vmatprep.subr.mxu0 0.0
    %1939 = vmatpush1.msra.mxu0 %v1075
    %1940 = vmatprep.subr.mxu0 0.0
    %1941 = vmatpush1.msra.mxu0 %v1076
    %1942 = vmatprep.subr.mxu0 0.0
    %1943 = vmatpush1.msra.mxu0 0.0
    %1944 = vmatprep.subr.mxu0 0.0
    %1945 = vmatpush1.msra.mxu0 0.0
    %1946 = vmatprep.subr.mxu0 0.0
    %1947 = vmatpush1.msra.mxu0 0.0
    %1948 = vmatprep.subr.mxu0 0.0
    %1949 = vmatpush1.msra.mxu0 0.0
    %1950 = vmatprep.subr.mxu0 0.0
    %1951 = vmatpush1.msra.mxu0 0.0
    %1952 = vmatprep.subr.mxu0 0.0
    %1953 = vmatpush1.msra.mxu0 0.0
    %1954 = vmatprep.subr.mxu0 0.0
    %1955 = vmatpush1.msra.mxu0 0.0
    %1956 = vmatprep.subr.mxu0 0.0
    %1957 = vmatpush1.msra.mxu0 0.0
    %1958 = vmatprep.subr.mxu0 0.0
    %1959 = vmatpush1.msra.mxu0 0.0
    %1960 = vmatprep.subr.mxu0 0.0
    %1961 = vmatpush1.msra.mxu0 0.0
    %1962 = vmatprep.subr.mxu0 0.0
    %1963 = vmatpush1.msra.mxu0 0.0
    %1964 = vmatprep.subr.mxu0 0.0
    %1965 = vmatpush1.msra.mxu0 0.0
    %1966 = vmatprep.subr.mxu0 0.0
    %1967 = vmatpush1.msra.mxu0 0.0
    %1968 = vmatprep.subr.mxu0 0.0
    %1969 = vmatpush1.msra.mxu0 0.0
    %1970 = vmatprep.subr.mxu0 0.0
    %1971 = vmatpush1.msra.mxu0 0.0
    %1972 = vmatprep.subr.mxu0 0.0
    %1973 = vmatpush1.msra.mxu0 0.0
    %1974 = vmatprep.subr.mxu0 0.0
    %1975 = vmatpush1.msra.mxu0 0.0
    %1976 = vmatprep.subr.mxu0 0.0
    %1977 = vmatpush1.msra.mxu0 0.0
    %1978 = vmatprep.subr.mxu0 0.0
    %1979 = vmatpush1.msra.mxu0 0.0
    %1980 = vmatprep.subr.mxu0 0.0
    %1981 = vmatpush1.msra.mxu0 0.0
    %1982 = vmatprep.subr.mxu0 0.0
    %1983 = vmatpush1.msra.mxu0 0.0
    %1984 = vmatprep.subr.mxu0 0.0
    %1985 = vmatpush1.msra.mxu0 0.0
    %1986 = vmatprep.subr.mxu0 0.0
    %1987 = vmatpush1.msra.mxu0 0.0
    %1988 = vmatprep.subr.mxu0 0.0
    %1989 = vmatpush1.msra.mxu0 0.0
    %1990 = vmatprep.subr.mxu0 0.0
    %1991 = vmatpush1.msra.mxu0 0.0
    %1992 = vmatprep.subr.mxu0 0.0
    %1993 = vmatpush1.msra.mxu0 0.0
    %1994 = vmatprep.subr.mxu0 0.0
    %1995 = vmatpush1.msra.mxu0 0.0
    %1996 = vmatprep.subr.mxu0 0.0
    %1997 = vmatpush1.msra.mxu0 0.0
    %1998 = vmatprep.subr.mxu0 0.0
    %1999 = vmatpush1.msra.mxu0 0.0
    %2000 = vmatprep.subr.mxu0 0.0
    %2001 = vmatpush1.msra.mxu0 0.0
    %2002 = vmatprep.mubr.f32.mxu0 0.0
    %2003 = vmatmul.mubr.f32.gmra.mrb[0].mxu0 %v1936
    %v2004 = vpop.f32.mrb[0].mxu0
    %v2005 = vadd.f32 0.0, %v2004
    %v2006 = vpop.f32.mrb[0].mxu0
    %2007 = vdwg.mxu0
    %v2008 = vadd.f32 %v1932, %v2005
    %v2009 = vxor.u32 %v2008, 2147483648
    %v2010 = vmul.f32 %v2009, 1.442695
    %v2011 = vpow.pop %v2010
    %v2012 = vadd.f32 %v2011, 1.0
    %v2013 = vrcp.pop %v2012
    %v2014 = vmul.f32 1.0, %v2013
    %v2015 = vtanh.pop %v2008
    %v2016 = vmul.f32 %v2014, %v1925
    %2018 = vrot.lane.b32.xlu0 %v2015, 80
    %v2019 = vpop.permute.xlu0 %2018
    %v2021 = vmul.f32 %v2014, %v2019
    %2023 = vrot.lane.b32.xlu0 %v2021, 16
    %v2024 = vpop.permute.xlu0 %2023
    %v2026 = vadd.f32 %v2016, %v2024
    %v2027 = vtanh.pop %v2026
    %2029 = vrot.lane.b32.xlu0 %v2027, 16
    %v2030 = vpop.permute.xlu0 %2029
    %v2032 = vmul.f32 %v2014, %v2030
    %v2033 = vld [vmem:[#allocation7] sm:$0xff]
    %2035 = vrot.lane.b32.xlu0 %v2032, 96
    %v2036 = vpop.permute.xlu0 %2035
    %v2037 = vsel %vm93, %v2036, 0
    %v2040 = vsel %vm93, %v2033, 0
    %2042 = vmatprep.subr.mxu0 0.0
    %2043 = vmatpush1.xpose.msra.mxu0 %v2040
    %2044 = vmatprep.subr.mxu0 0.0
    %2045 = vmatpush1.xpose.msra.mxu0 0.0
    %2046 = vmatprep.subr.mxu0 0.0
    %2047 = vmatpush1.xpose.msra.mxu0 0.0
    %2048 = vmatprep.subr.mxu0 0.0
    %2049 = vmatpush1.xpose.msra.mxu0 0.0
    %2050 = vmatprep.subr.mxu0 0.0
    %2051 = vmatpush1.xpose.msra.mxu0 0.0
    %2052 = vmatprep.subr.mxu0 0.0
    %2053 = vmatpush1.xpose.msra.mxu0 0.0
    %2054 = vmatprep.subr.mxu0 0.0
    %2055 = vmatpush1.xpose.msra.mxu0 0.0
    %2056 = vmatprep.subr.mxu0 0.0
    %2057 = vmatpush1.xpose.msra.mxu0 0.0
    %2058 = vmatprep.subr.mxu0 0.0
    %2059 = vmatpush1.xpose.msra.mxu0 0.0
    %2060 = vmatprep.subr.mxu0 0.0
    %2061 = vmatpush1.xpose.msra.mxu0 0.0
    %2062 = vmatprep.subr.mxu0 0.0
    %2063 = vmatpush1.xpose.msra.mxu0 0.0
    %2064 = vmatprep.subr.mxu0 0.0
    %2065 = vmatpush1.xpose.msra.mxu0 0.0
    %2066 = vmatprep.subr.mxu0 0.0
    %2067 = vmatpush1.xpose.msra.mxu0 0.0
    %2068 = vmatprep.subr.mxu0 0.0
    %2069 = vmatpush1.xpose.msra.mxu0 0.0
    %2070 = vmatprep.subr.mxu0 0.0
    %2071 = vmatpush1.xpose.msra.mxu0 0.0
    %2072 = vmatprep.subr.mxu0 0.0
    %2073 = vmatpush1.xpose.msra.mxu0 0.0
    %2074 = vmatprep.subr.mxu0 0.0
    %2075 = vmatpush1.xpose.msra.mxu0 0.0
    %2076 = vmatprep.subr.mxu0 0.0
    %2077 = vmatpush1.xpose.msra.mxu0 0.0
    %2078 = vmatprep.subr.mxu0 0.0
    %2079 = vmatpush1.xpose.msra.mxu0 0.0
    %2080 = vmatprep.subr.mxu0 0.0
    %2081 = vmatpush1.xpose.msra.mxu0 0.0
    %2082 = vmatprep.subr.mxu0 0.0
    %2083 = vmatpush1.xpose.msra.mxu0 0.0
    %2084 = vmatprep.subr.mxu0 0.0
    %2085 = vmatpush1.xpose.msra.mxu0 0.0
    %2086 = vmatprep.subr.mxu0 0.0
    %2087 = vmatpush1.xpose.msra.mxu0 0.0
    %2088 = vmatprep.subr.mxu0 0.0
    %2089 = vmatpush1.xpose.msra.mxu0 0.0
    %2090 = vmatprep.subr.mxu0 0.0
    %2091 = vmatpush1.xpose.msra.mxu0 0.0
    %2092 = vmatprep.subr.mxu0 0.0
    %2093 = vmatpush1.xpose.msra.mxu0 0.0
    %2094 = vmatprep.subr.mxu0 0.0
    %2095 = vmatpush1.xpose.msra.mxu0 0.0
    %2096 = vmatprep.subr.mxu0 0.0
    %2097 = vmatpush1.xpose.msra.mxu0 0.0
    %2098 = vmatprep.subr.mxu0 0.0
    %2099 = vmatpush1.xpose.msra.mxu0 0.0
    %2100 = vmatprep.subr.mxu0 0.0
    %2101 = vmatpush1.xpose.msra.mxu0 0.0
    %2102 = vmatprep.subr.mxu0 0.0
    %2103 = vmatpush1.xpose.msra.mxu0 0.0
    %2104 = vmatprep.subr.mxu0 0.0
    %2105 = vmatpush1.xpose.msra.mxu0 0.0
    %2106 = vmatprep.mubr.f32.mxu0 0.0
    %2107 = vmatmul.mubr.f32.gmra.mrb[0].mxu0 %v2037
    %v2108 = vpop.f32.mrb[0].mxu0
    %v2109 = vadd.f32 0.0, %v2108
    %v2110 = vpop.f32.mrb[0].mxu0
    %2111 = vdwg.mxu0
    %v2112 = vmul.f32 %v2032, %v2032
    %2114 = vrot.lane.b32.xlu0 %v2112, 96
    %v2115 = vpop.permute.xlu0 %2114
    %v2117 = vsel %vm93, %v2115, 0.0
    %2118 = vadd.xlane.f32.xlu0 %v2117
    %v2119 = vpop.xlane.xlu0 %2118
    %v2120 = vmul.f32 %v2033, %v2033
    %v2121 = vsel %vm93, %v2120, 0.0
    %2122 = vadd.xlane.f32.xlu0 %v2121
    %v2123 = vpop.xlane.xlu0 %2122
    %v2124 = vmul.f32 %v2109, 2.0
    %v2125 = vsub.f32 %v2124, %v2119
    %2126 = vxpose.xlu0.b32.start [1/16] %v2123, 128
    %2127 = vxpose.xlu0.b32.cont [2/16] 0.0, 128
    %2128 = vxpose.xlu0.b32.cont [3/16] 0.0, 128
    %2129 = vxpose.xlu0.b32.cont [4/16] 0.0, 128
    %2130 = vxpose.xlu0.b32.cont [5/16] 0.0, 128
    %2131 = vxpose.xlu0.b32.cont [6/16] 0.0, 128
    %2132 = vxpose.xlu0.b32.cont [7/16] 0.0, 128
    %2133 = vxpose.xlu0.b32.cont [8/16] 0.0, 128
    %2134 = vxpose.xlu0.b32.cont [9/16] 0.0, 128
    %2135 = vxpose.xlu0.b32.cont [10/16] 0.0, 128
    %2136 = vxpose.xlu0.b32.cont [11/16] 0.0, 128
    %2137 = vxpose.xlu0.b32.cont [12/16] 0.0, 128
    %2138 = vxpose.xlu0.b32.cont [13/16] 0.0, 128
    %2139 = vxpose.xlu0.b32.cont [14/16] 0.0, 128
    %2140 = vxpose.xlu0.b32.cont [15/16] 0.0, 128
    %2141 = vxpose.xlu0.b32.end [16/16] 0.0, 128
    %v2142 = vpop.trf.xlu0
    %v2143 = vpop.trf.xlu0
    %v2144 = vpop.trf.xlu0
    %v2145 = vpop.trf.xlu0
    %v2146 = vpop.trf.xlu0
    %v2147 = vpop.trf.xlu0
    %v2148 = vpop.trf.xlu0
    %v2149 = vpop.trf.xlu0
    %v2150 = vpop.trf.xlu0
    %v2151 = vpop.trf.xlu0
    %v2152 = vpop.trf.xlu0
    %v2153 = vpop.trf.xlu0
    %v2154 = vpop.trf.xlu0
    %v2155 = vpop.trf.xlu0
    %v2156 = vpop.trf.xlu0
    %v2157 = vpop.trf.xlu0
    %v2158 = vlaneseq
    %v2159 = vshrl.u32 %v2158, 7
    %v2160 = vsub.s32 0, %v2159
    %v2161 = vrot.slane %v2142, %v2160
    %v2162 = vsub.f32 %v2125, %v2161
    %vm2163 = vcmask 64512
    %2164 = vst.msk [vmem:[#allocation12] sm:$0xff] %vm2163, %v2162
    // Predicated region
    $region38: #{tpu_custom_call.1} parent=1 // pred_check
      _
    $region39: #{tpu_custom_call.1} parent=1 // pred_check_branch
      %2166 = sbr.rel (0) target = $region41
    $region40: #{tpu_custom_call.1} parent=1 // pred_region
      %s2168 = ssub.s32 128, 128
      %2169 = vsyncadd [#allocation6], %s2168
      %s2171 = sshll.u32 [#allocation12], 4
      %s2172 = int_to_ptr.vmem [resolvable:$true] %s2171
      %2174 = dma.vmem_to_hbm [thread:$0]  %s2172, 128, %s5, [#allocation6]
    $region41: #{tpu_custom_call.1} parent=1 // pred_fallthru
      _
    // Predicated region
    $region42: #{tpu_custom_call.1} parent=1 // pred_check
      _
    $region43: #{tpu_custom_call.1} parent=1 // pred_check_branch
      %2176 = sbr.rel (0) target = $region45
    $region44: #{tpu_custom_call.1} parent=1 // pred_region
      %2177 = dma.done [#allocation6], 128
    $region45: #{tpu_custom_call.1} parent=1 // pred_fallthru
      _
    %2178 = vsyncpa [#allocation5], 1
    %2179 = vsyncpa [#allocation8], 1
    %2180 = vsyncpa [#allocation11], 1
    %2181 = vsyncpa [#allocation6], 1

</llo_original>
